<compile_context>
chip_gen: v7x
topology: tpu7x:2x2x1
jax: 0.10.0
libtpu: 0.0.40
codegen_flags: <defaults>
</compile_context>

<pallas_src>
import functools

import jax
import jax.numpy as jnp
from jax import lax
from jax.experimental import pallas as pl
from jax.experimental.pallas import tpu as pltpu

_BN_EPS = 1e-5
_CT = 128                        # cout lane tile (vreg lane width)
_VMEM_LIMIT = 32 * 1024 * 1024   # explicit scoped-VMEM bound (fits all gens)


def _round_up(v, m):
    return (v + m - 1) // m * m


def _bn_scale_shift(sum_v, sq_v, gamma, beta, count):
    """Per-channel BN scale/shift from full-batch sum / sum-of-squares."""
    inv = jnp.float32(1.0 / count)
    mean = sum_v * inv
    var = sq_v * inv - mean * mean            # biased (training-mode) variance
    scale = lax.rsqrt(var + _BN_EPS) * gamma
    shift = beta - mean * scale
    return scale, shift


def _gather_tap_slab(x_ref, taps, stride, ho, wo):
    """Fold conv taps of a (1,Hp,Wp,Cin) ref into a (ho*wo, taps*Cin) slab."""
    cin = x_ref.shape[-1]
    patches = []
    if stride == 1:
        for kh, kw in taps:
            patches.append(x_ref[:, pl.ds(kh, ho), pl.ds(kw, wo), :])
    else:
        # Polyphase: de-interleave once (<=4 strided reads), then take
        # contiguous value slices per tap instead of 9 strided gathers.
        hp, wp = x_ref.shape[1], x_ref.shape[2]
        phases = {}
        for kh, kw in taps:
            a, b = kh % stride, kw % stride
            if (a, b) not in phases:
                na = (hp - a + stride - 1) // stride
                nb = (wp - b + stride - 1) // stride
                phases[(a, b)] = x_ref[:, pl.ds(a, na, stride=stride),
                                       pl.ds(b, nb, stride=stride), :]
            ph = phases[(a, b)]
            i0, j0 = kh // stride, kw // stride
            patches.append(ph[:, i0:i0 + ho, j0:j0 + wo, :])
    slab = patches[0] if len(patches) == 1 else jnp.concatenate(patches, axis=-1)
    return slab.reshape(ho * wo, len(taps) * cin)


# -------------------- kernel 1: conv + BN partial stats ------------------------
def _conv_stats_kernel(x_ref, w_ref, y_ref, sum_ref, sq_ref, *, taps, stride):
    """One (cout tile, batch image) grid step: fat-K conv matmul + stats."""
    _, ho, wo, ct = y_ref.shape
    slab = _gather_tap_slab(x_ref, taps, stride, ho, wo)

    # Single MXU matmul: native-dtype operands, f32 accumulation.
    acc = jnp.dot(slab, w_ref[...], preferred_element_type=jnp.float32)
    y_ref[...] = acc.reshape(1, ho, wo, ct)

    @pl.when(pl.program_id(1) == 0)
    def _():
        sum_ref[...] = jnp.zeros_like(sum_ref)
        sq_ref[...] = jnp.zeros_like(sq_ref)

    sum_ref[...] += jnp.sum(acc, axis=0, keepdims=True)
    sq_ref[...] += jnp.sum(acc * acc, axis=0, keepdims=True)


def _conv_stats(xpad, w2d, *, taps, stride, ho, wo):
    n, hp, wp, cin_p = xpad.shape
    ktot, cout_p = w2d.shape
    nct = cout_p // _CT
    kern = functools.partial(_conv_stats_kernel, taps=taps, stride=stride)
    return pl.pallas_call(
        kern,
        out_shape=(jax.ShapeDtypeStruct((n, ho, wo, cout_p), jnp.float32),
                   jax.ShapeDtypeStruct((1, cout_p), jnp.float32),
                   jax.ShapeDtypeStruct((1, cout_p), jnp.float32)),
        grid=(nct, n),
        in_specs=[pl.BlockSpec((1, hp, wp, cin_p), lambda co, b: (b, 0, 0, 0)),
                  pl.BlockSpec((ktot, _CT), lambda co, b: (0, co))],
        out_specs=(pl.BlockSpec((1, ho, wo, _CT), lambda co, b: (b, 0, 0, co)),
                   pl.BlockSpec((1, _CT), lambda co, b: (0, co)),
                   pl.BlockSpec((1, _CT), lambda co, b: (0, co))),
        compiler_params=pltpu.CompilerParams(
            dimension_semantics=("parallel", "arbitrary"),
            vmem_limit_bytes=_VMEM_LIMIT),
    )(xpad, w2d)


# ----- kernel 2: bn1 + ReLU (fused) -> in-VMEM halo pad -> conv2 + bn2 stats ----
def _bn_relu_conv_stats_kernel(y_ref, s1_ref, q1_ref, g1_ref, b1_ref, w_ref,
                               o_ref, sum_ref, sq_ref, pad_ref, *, count):
    """y_ref: (1,H,W,C1p) raw conv1 output (f32). Normalize+ReLU it, zero-pad
    into a VMEM scratch (halo for padding=1), then one fat-K matmul for conv2.
    The bn1 normalize is recomputed per cout tile of layer 2 (cheap VPU work)
    to avoid ever spilling the activation back to HBM."""
    _, ho, wo, ct = o_ref.shape
    cin = y_ref.shape[-1]
    rows = ho * wo

    scale, shift = _bn_scale_shift(s1_ref[...], q1_ref[...], g1_ref[...],
                                   b1_ref[...], count)
    act = jnp.maximum(y_ref[...].reshape(rows, cin) * scale + shift, 0.0)

    # Zero the halo scratch at the first batch step (borders are never
    # rewritten afterwards; interior is overwritten every step).
    @pl.when(pl.program_id(1) == 0)
    def _():
        pad_ref[...] = jnp.zeros_like(pad_ref)
    pad_ref[:, pl.ds(1, ho), pl.ds(1, wo), :] = (
        act.astype(pad_ref.dtype).reshape(1, ho, wo, cin))

    slab = _gather_tap_slab(
        pad_ref, tuple((kh, kw) for kh in range(3) for kw in range(3)), 1, ho, wo)
    acc = jnp.dot(slab, w_ref[...], preferred_element_type=jnp.float32)
    o_ref[...] = acc.reshape(1, ho, wo, ct)

    @pl.when(pl.program_id(1) == 0)
    def _():
        sum_ref[...] = jnp.zeros_like(sum_ref)
        sq_ref[...] = jnp.zeros_like(sq_ref)

    sum_ref[...] += jnp.sum(acc, axis=0, keepdims=True)
    sq_ref[...] += jnp.sum(acc * acc, axis=0, keepdims=True)


def _bn_relu_conv_stats(y1_raw, stats1, g1, b1, w2d, *, count, compute_dtype):
    n, ho, wo, cin_p = y1_raw.shape
    ktot, cout_p = w2d.shape
    nct = cout_p // _CT
    s1, q1 = stats1
    kern = functools.partial(_bn_relu_conv_stats_kernel, count=count)

    def full_vec(co, b):
        return (0, 0)

    return pl.pallas_call(
        kern,
        out_shape=(jax.ShapeDtypeStruct((n, ho, wo, cout_p), jnp.float32),
                   jax.ShapeDtypeStruct((1, cout_p), jnp.float32),
                   jax.ShapeDtypeStruct((1, cout_p), jnp.float32)),
        grid=(nct, n),
        in_specs=[pl.BlockSpec((1, ho, wo, cin_p), lambda co, b: (b, 0, 0, 0)),
                  pl.BlockSpec((1, cin_p), full_vec),
                  pl.BlockSpec((1, cin_p), full_vec),
                  pl.BlockSpec((1, cin_p), full_vec),
                  pl.BlockSpec((1, cin_p), full_vec),
                  pl.BlockSpec((ktot, _CT), lambda co, b: (0, co))],
        out_specs=(pl.BlockSpec((1, ho, wo, _CT), lambda co, b: (b, 0, 0, co)),
                   pl.BlockSpec((1, _CT), lambda co, b: (0, co)),
                   pl.BlockSpec((1, _CT), lambda co, b: (0, co))),
        scratch_shapes=[pltpu.VMEM((1, ho + 2, wo + 2, cin_p), compute_dtype)],
        compiler_params=pltpu.CompilerParams(
            dimension_semantics=("parallel", "arbitrary"),
            vmem_limit_bytes=_VMEM_LIMIT),
    )(y1_raw, s1, q1, g1, b1, w2d)


# ---- kernel 3: bn2 normalize + residual (identity / fused bn_short) + ReLU -----
def _bn_residual_relu_kernel(y_ref, s2_ref, q2_ref, g2_ref, b2_ref, *rest,
                             count, proj):
    o_ref = rest[-1]
    _, ho, wo, ct = y_ref.shape
    rows = ho * wo

    scale, shift = _bn_scale_shift(s2_ref[...], q2_ref[...], g2_ref[...],
                                   b2_ref[...], count)
    out = y_ref[...].reshape(rows, ct) * scale + shift

    if proj:
        # residual = bn_short(shortcut conv) computed here from the raw conv
        # output + its stats (never materialized normalized in HBM).
        sraw_ref, ss_ref, sq_ref, gs_ref, bs_ref = rest[:-1]
        s_scale, s_shift = _bn_scale_shift(ss_ref[...], sq_ref[...],
                                           gs_ref[...], bs_ref[...], count)
        out = out + (sraw_ref[...].reshape(rows, ct) * s_scale + s_shift)
    else:
        # identity residual read straight from the spatially padded input.
        (res_ref,) = rest[:-1]
        r = res_ref[:, pl.ds(1, ho), pl.ds(1, wo), :]
        out = out + r.reshape(rows, ct).astype(jnp.float32)

    o_ref[...] = jnp.maximum(out, 0.0).reshape(1, ho, wo, ct).astype(o_ref.dtype)


def _bn_residual_relu(y2_raw, stats2, g2, b2, *, count, out_dtype,
                      residual_pad=None, shortcut=None):
    n, ho, wo, cout_p = y2_raw.shape
    nct = cout_p // _CT
    s2, q2 = stats2
    proj = shortcut is not None
    kern = functools.partial(_bn_residual_relu_kernel, count=count, proj=proj)

    def vec(co, b):
        return (0, co)

    in_specs = [pl.BlockSpec((1, ho, wo, _CT), lambda co, b: (b, 0, 0, co)),
                pl.BlockSpec((1, _CT), vec), pl.BlockSpec((1, _CT), vec),
                pl.BlockSpec((1, _CT), vec), pl.BlockSpec((1, _CT), vec)]
    args = [y2_raw, s2, q2, g2, b2]
    if proj:
        s_raw, ss, sq, gs, bs = shortcut
        in_specs += [pl.BlockSpec((1, ho, wo, _CT), lambda co, b: (b, 0, 0, co)),
                     pl.BlockSpec((1, _CT), vec), pl.BlockSpec((1, _CT), vec),
                     pl.BlockSpec((1, _CT), vec), pl.BlockSpec((1, _CT), vec)]
        args += [s_raw, ss, sq, gs, bs]
    else:
        rh, rw = residual_pad.shape[1], residual_pad.shape[2]
        in_specs.append(
            pl.BlockSpec((1, rh, rw, _CT), lambda co, b: (b, 0, 0, co)))
        args.append(residual_pad)

    return pl.pallas_call(
        kern,
        out_shape=jax.ShapeDtypeStruct((n, ho, wo, cout_p), out_dtype),
        grid=(nct, n),
        in_specs=in_specs,
        out_specs=pl.BlockSpec((1, ho, wo, _CT), lambda co, b: (b, 0, 0, co)),
        compiler_params=pltpu.CompilerParams(
            dimension_semantics=("parallel", "parallel"),
            vmem_limit_bytes=_VMEM_LIMIT),
    )(*args)


# ------------------------------- parameter prep --------------------------------
def _prep_conv_weight(w_oihw, dtype):
    """OIHW conv weight -> folded (KH*KW*Cin_p, Cout_p) MXU operand."""
    cout, cin, kh, kw = w_oihw.shape
    cin_p, cout_p = _round_up(cin, _CT), _round_up(cout, _CT)
    wt = jnp.transpose(w_oihw, (2, 3, 1, 0))                # (KH, KW, Cin, Cout)
    wt = jnp.pad(wt, ((0, 0), (0, 0), (0, cin_p - cin), (0, cout_p - cout)))
    return wt.reshape(kh * kw * cin_p, cout_p).astype(dtype)


def _prep_bn_param(p, cout_p):
    p = jnp.asarray(p, jnp.float32).reshape(1, -1)
    return jnp.pad(p, ((0, 0), (0, cout_p - p.shape[-1])))


# --------------------------------- forward -------------------------------------
def resnet_block18_forward(x, conv1_w, conv2_w, short_w=None, *,
                           bn1_params, bn2_params, bn_short_params=None):
    """ResNetBlock18.forward. x: NCHW; conv weights: OIHW (PyTorch layout)."""
    n, cin, h, w = x.shape
    dt = x.dtype
    cin_p = _round_up(cin, _CT)
    c1, c2 = conv1_w.shape[0], conv2_w.shape[0]
    c1_p, c2_p = _round_up(c1, _CT), _round_up(c2, _CT)

    # glue: NCHW -> NHWC, lane-pad channels to 128, spatial zero-pad once for
    # the "padding=1" convs (the stride-2 shortcut and the identity residual
    # read the same buffer at a (1,1) offset -> one padded copy of x total).
    x_nhwc = jnp.transpose(x, (0, 2, 3, 1))
    xpad = jnp.pad(x_nhwc, ((0, 0), (1, 1), (1, 1), (0, cin_p - cin)))

    w1 = _prep_conv_weight(conv1_w, dt)
    w2 = _prep_conv_weight(conv2_w, dt)
    g1, b1 = [_prep_bn_param(p, c1_p) for p in bn1_params]
    g2, b2 = [_prep_bn_param(p, c2_p) for p in bn2_params]
    taps3 = tuple((kh, kw) for kh in range(3) for kw in range(3))

    if short_w is not None:
        stride1 = 2
        ho = (h - 1) // 2 + 1
        wo = (w - 1) // 2 + 1
        cs = short_w.shape[0]
        cs_p = _round_up(cs, _CT)
        gs, bs = [_prep_bn_param(p, cs_p) for p in bn_short_params]
        # short_w.mean(dim=(2,3)) hoisted to the wrapper -> 1x1 stride-2 conv
        # (9x smaller weight DMA, no in-kernel cross-sublane reduction).
        ws = jnp.transpose(short_w.mean(axis=(2, 3)))              # (Cin, Cs)
        ws = jnp.pad(ws, ((0, cin_p - cin), (0, cs_p - cs))).astype(dt)
        s_raw, s_sum, s_sq = _conv_stats(xpad, ws, taps=((1, 1),), stride=2,
                                         ho=ho, wo=wo)
        shortcut = (s_raw, s_sum, s_sq, gs, bs)
        residual_pad = None
    else:
        assert cin == c2, "identity shortcut requires cin == layer2[0]"
        stride1 = 1
        ho, wo = h, w
        shortcut = None
        residual_pad = xpad      # identity shortcut; halo sliced off in-kernel

    count = n * ho * wo

    # conv1 + bn1 partial stats
    y1_raw, y1_sum, y1_sq = _conv_stats(xpad, w1, taps=taps3, stride=stride1,
                                        ho=ho, wo=wo)
    # bn1 apply + ReLU fused into conv2 (+ bn2 partial stats); y1 never hits HBM
    # in normalized form and no wrapper re-pad is needed.
    y2_raw, y2_sum, y2_sq = _bn_relu_conv_stats(y1_raw, (y1_sum, y1_sq), g1, b1,
                                                w2, count=count,
                                                compute_dtype=dt)
    # bn2 apply + residual (identity or fused bn_short) + final ReLU
    out = _bn_residual_relu(y2_raw, (y2_sum, y2_sq), g2, b2, count=count,
                            out_dtype=dt, residual_pad=residual_pad,
                            shortcut=shortcut)

    # strip channel lane-padding, back to NCHW
    return jnp.transpose(out[..., :c2], (0, 3, 1, 2))


# ----------------------- pure-JAX reference (for checking) ----------------------
def _ref_bn(y, gamma, beta):
    mean = y.mean(axis=(0, 2, 3), keepdims=True)
    var = ((y - mean) ** 2).mean(axis=(0, 2, 3), keepdims=True)
    return ((y - mean) / jnp.sqrt(var + _BN_EPS) * gamma.reshape(1, -1, 1, 1)
            + beta.reshape(1, -1, 1, 1))


def _ref_conv(x, w, stride, pad):
    return lax.conv_general_dilated(
        x, w, (stride, stride), ((pad, pad), (pad, pad)),
        dimension_numbers=("NCHW", "OIHW", "NCHW"))


def _ref_forward(x, conv1_w, conv2_w, short_w, bn1, bn2, bns):
    g1, b1 = bn1
    g2, b2 = bn2
    if short_w is not None:
        gs, bs = bns
        swm = short_w.mean(axis=(2, 3), keepdims=True)
        residual = _ref_bn(_ref_conv(x, swm, 2, 0), gs, bs)
        out = jax.nn.relu(_ref_bn(_ref_conv(x, conv1_w, 2, 1), g1, b1))
    else:
        residual = x
        out = jax.nn.relu(_ref_bn(_ref_conv(x, conv1_w, 1, 1), g1, b1))
    out = _ref_bn(_ref_conv(out, conv2_w, 1, 1), g2, b2)
    return jax.nn.relu(out + residual)


if __name__ == "__main__":
    key = jax.random.PRNGKey(0)
    kx, k1, k2, k3, k4, k5 = jax.random.split(key, 6)

    n, c, h, w = 2, 4, 16, 16
    x = jax.random.normal(kx, (n, c, h, w), jnp.float32)

    # --- Path A: identity shortcut (short_layer=None), layer1=layer2=(4, 4) ---
    conv1_w = 0.1 * jax.random.normal(k1, (4, 4, 3, 3), jnp.float32)
    conv2_w = 0.1 * jax.random.normal(k2, (4, 4, 3, 3), jnp.float32)
    bn1 = (jnp.ones((4,), jnp.float32), jnp.zeros((4,), jnp.float32))
    bn2 = (jnp.ones((4,), jnp.float32), jnp.zeros((4,), jnp.float32))
    out_a = resnet_block18_forward(x, conv1_w, conv2_w, None,
                                   bn1_params=bn1, bn2_params=bn2)
    out_a = jax.block_until_ready(out_a)
    ref_a = _ref_forward(x, conv1_w, conv2_w, None, bn1, bn2, None)
    assert out_a.shape == (n, 4, h, w)
    assert jnp.allclose(out_a, ref_a, atol=1e-4, rtol=1e-4)

    # --- Path B: projection shortcut (short_layer=(8, 4)), stride 2 ---
    c1 = c2 = cs = 8
    conv1_ws = 0.1 * jax.random.normal(k3, (c1, c, 3, 3), jnp.float32)
    conv2_ws = 0.1 * jax.random.normal(k4, (c2, c1, 3, 3), jnp.float32)
    short_w = 0.1 * jax.random.normal(k5, (cs, c, 3, 3), jnp.float32)
    bn1s = (jnp.ones((c1,), jnp.float32), jnp.zeros((c1,), jnp.float32))
    bn2s = (jnp.ones((c2,), jnp.float32), jnp.zeros((c2,), jnp.float32))
    bnss = (jnp.ones((cs,), jnp.float32), jnp.zeros((cs,), jnp.float32))
    out_b = resnet_block18_forward(x, conv1_ws, conv2_ws, short_w,
                                   bn1_params=bn1s, bn2_params=bn2s,
                                   bn_short_params=bnss)
    out_b = jax.block_until_ready(out_b)
    ref_b = _ref_forward(x, conv1_ws, conv2_ws, short_w, bn1s, bn2s, bnss)
    assert out_b.shape == (n, c2, h // 2, w // 2)
    assert jnp.allclose(out_b, ref_b, atol=1e-4, rtol=1e-4)

    print("KERNEL_OK")
</pallas_src>

<mosaic_0001>
module attributes {stable_mosaic.version = 11 : i64} {
  func.func @_conv_stats_kernel(%arg0: i32, %arg1: i32, %arg2: memref<1x18x18x128xf32, #tpu.memory_space<vmem>>, %arg3: memref<1152x128xf32, #tpu.memory_space<vmem>>, %arg4: memref<1x16x16x128xf32, #tpu.memory_space<vmem>>, %arg5: memref<1x128xf32, #tpu.memory_space<vmem>>, %arg6: memref<1x128xf32, #tpu.memory_space<vmem>>) attributes {dimension_semantics = [#tpu.dimension_semantics<parallel>, #tpu.dimension_semantics<arbitrary>], iteration_bounds = array<i64: 1, 2>, scalar_prefetch = 0 : i64, scratch_operands = 0 : i64, tpu.core_type = #tpu.core_type<tc>, window_params = [{transform_indices = @transform_0, window_bounds = array<i64: 1, 18, 18, 128>}, {transform_indices = @transform_1, window_bounds = array<i64: 1152, 128>}, {transform_indices = @transform_2, window_bounds = array<i64: 1, 16, 16, 128>}, {transform_indices = @transform_3, window_bounds = array<i64: 1, 128>}, {transform_indices = @transform_4, window_bounds = array<i64: 1, 128>}]} {
    %c0 = arith.constant 0 : index
    %c0_0 = arith.constant 0 : index
    %c0_1 = arith.constant 0 : index
    %c0_2 = arith.constant 0 : index
    %0 = vector.load %arg2[%c0, %c0_0, %c0_1, %c0_2] : memref<1x18x18x128xf32, #tpu.memory_space<vmem>>, vector<1x16x16x128xf32>
    %c0_3 = arith.constant 0 : index
    %c0_4 = arith.constant 0 : index
    %c1 = arith.constant 1 : index
    %c0_5 = arith.constant 0 : index
    %1 = vector.load %arg2[%c0_3, %c0_4, %c1, %c0_5] : memref<1x18x18x128xf32, #tpu.memory_space<vmem>>, vector<1x16x16x128xf32>
    %c0_6 = arith.constant 0 : index
    %c0_7 = arith.constant 0 : index
    %c2 = arith.constant 2 : index
    %c0_8 = arith.constant 0 : index
    %2 = vector.load %arg2[%c0_6, %c0_7, %c2, %c0_8] : memref<1x18x18x128xf32, #tpu.memory_space<vmem>>, vector<1x16x16x128xf32>
    %c0_9 = arith.constant 0 : index
    %c1_10 = arith.constant 1 : index
    %c0_11 = arith.constant 0 : index
    %c0_12 = arith.constant 0 : index
    %3 = vector.load %arg2[%c0_9, %c1_10, %c0_11, %c0_12] : memref<1x18x18x128xf32, #tpu.memory_space<vmem>>, vector<1x16x16x128xf32>
    %c0_13 = arith.constant 0 : index
    %c1_14 = arith.constant 1 : index
    %c1_15 = arith.constant 1 : index
    %c0_16 = arith.constant 0 : index
    %4 = vector.load %arg2[%c0_13, %c1_14, %c1_15, %c0_16] : memref<1x18x18x128xf32, #tpu.memory_space<vmem>>, vector<1x16x16x128xf32>
    %c0_17 = arith.constant 0 : index
    %c1_18 = arith.constant 1 : index
    %c2_19 = arith.constant 2 : index
    %c0_20 = arith.constant 0 : index
    %5 = vector.load %arg2[%c0_17, %c1_18, %c2_19, %c0_20] : memref<1x18x18x128xf32, #tpu.memory_space<vmem>>, vector<1x16x16x128xf32>
    %c0_21 = arith.constant 0 : index
    %c2_22 = arith.constant 2 : index
    %c0_23 = arith.constant 0 : index
    %c0_24 = arith.constant 0 : index
    %6 = vector.load %arg2[%c0_21, %c2_22, %c0_23, %c0_24] : memref<1x18x18x128xf32, #tpu.memory_space<vmem>>, vector<1x16x16x128xf32>
    %c0_25 = arith.constant 0 : index
    %c2_26 = arith.constant 2 : index
    %c1_27 = arith.constant 1 : index
    %c0_28 = arith.constant 0 : index
    %7 = vector.load %arg2[%c0_25, %c2_26, %c1_27, %c0_28] : memref<1x18x18x128xf32, #tpu.memory_space<vmem>>, vector<1x16x16x128xf32>
    %c0_29 = arith.constant 0 : index
    %c2_30 = arith.constant 2 : index
    %c2_31 = arith.constant 2 : index
    %c0_32 = arith.constant 0 : index
    %8 = vector.load %arg2[%c0_29, %c2_30, %c2_31, %c0_32] : memref<1x18x18x128xf32, #tpu.memory_space<vmem>>, vector<1x16x16x128xf32>
    %9 = tpu.concatenate %0, %1, %2, %3, %4, %5, %6, %7, %8 in 3 : vector<1x16x16x128xf32>, vector<1x16x16x128xf32>, vector<1x16x16x128xf32>, vector<1x16x16x128xf32>, vector<1x16x16x128xf32>, vector<1x16x16x128xf32>, vector<1x16x16x128xf32>, vector<1x16x16x128xf32>, vector<1x16x16x128xf32> -> vector<1x16x16x1152xf32>
    %10 = vector.shape_cast %9 : vector<1x16x16x1152xf32> to vector<256x1152xf32>
    %c0_33 = arith.constant 0 : index
    %c0_34 = arith.constant 0 : index
    %11 = vector.load %arg3[%c0_33, %c0_34] : memref<1152x128xf32, #tpu.memory_space<vmem>>, vector<1152x128xf32>
    %cst = arith.constant dense<0.000000e+00> : vector<256x128xf32>
    %12 = tpu.matmul %10, %11, %cst {dimension_numbers = #tpu.dot_dimension_numbers<[1], [0], [0], [1], [0, 0, 1, 1], [], []>} : vector<256x1152xf32>, vector<1152x128xf32>, vector<256x128xf32> -> vector<256x128xf32>
    %13 = vector.shape_cast %12 : vector<256x128xf32> to vector<1x16x16x128xf32>
    %c0_35 = arith.constant 0 : index
    %c0_36 = arith.constant 0 : index
    %c0_37 = arith.constant 0 : index
    %c0_38 = arith.constant 0 : index
    %14 = vector.load %arg4[%c0_35, %c0_36, %c0_37, %c0_38] : memref<1x16x16x128xf32, #tpu.memory_space<vmem>>, vector<1x16x16x128xf32>
    tpu.vector_store %arg4[%c0_35, %c0_36, %c0_37, %c0_38], %13 {strides = array<i32>} : memref<1x16x16x128xf32, #tpu.memory_space<vmem>>, vector<1x16x16x128xf32>,
    %c0_i32 = arith.constant 0 : i32
    %15 = arith.cmpi eq, %arg1, %c0_i32 : i32
    %16 = arith.extui %15 : i1 to i32
    %c0_i32_39 = arith.constant 0 : i32
    %17 = arith.cmpi ne, %16, %c0_i32_39 : i32
    scf.if %17 {
      %cst_50 = arith.constant 0.000000e+00 : f32
      %29 = vector.broadcast %cst_50 : f32 to vector<1x128xf32>
      %c0_51 = arith.constant 0 : index
      %c0_52 = arith.constant 0 : index
      %30 = vector.load %arg5[%c0_51, %c0_52] : memref<1x128xf32, #tpu.memory_space<vmem>>, vector<1x128xf32>
      tpu.vector_store %arg5[%c0_51, %c0_52], %29 {strides = array<i32>} : memref<1x128xf32, #tpu.memory_space<vmem>>, vector<1x128xf32>,
      %cst_53 = arith.constant 0.000000e+00 : f32
      %31 = vector.broadcast %cst_53 : f32 to vector<1x128xf32>
      %c0_54 = arith.constant 0 : index
      %c0_55 = arith.constant 0 : index
      %32 = vector.load %arg6[%c0_54, %c0_55] : memref<1x128xf32, #tpu.memory_space<vmem>>, vector<1x128xf32>
      tpu.vector_store %arg6[%c0_54, %c0_55], %31 {strides = array<i32>} : memref<1x128xf32, #tpu.memory_space<vmem>>, vector<1x128xf32>,
    } else {
    }
    %c0_40 = arith.constant 0 : index
    %c0_41 = arith.constant 0 : index
    %18 = vector.load %arg5[%c0_40, %c0_41] : memref<1x128xf32, #tpu.memory_space<vmem>>, vector<1x128xf32>
    %cst_42 = arith.constant dense<0.000000e+00> : vector<128xf32>
    %19 = vector.multi_reduction <add>, %12, %cst_42 [0] : vector<256x128xf32> to vector<128xf32>
    %20 = vector.shape_cast %19 : vector<128xf32> to vector<1x128xf32>
    %21 = arith.addf %18, %20 : vector<1x128xf32>
    %c0_43 = arith.constant 0 : index
    %c0_44 = arith.constant 0 : index
    %22 = vector.load %arg5[%c0_43, %c0_44] : memref<1x128xf32, #tpu.memory_space<vmem>>, vector<1x128xf32>
    tpu.vector_store %arg5[%c0_43, %c0_44], %21 {strides = array<i32>} : memref<1x128xf32, #tpu.memory_space<vmem>>, vector<1x128xf32>,
    %c0_45 = arith.constant 0 : index
    %c0_46 = arith.constant 0 : index
    %23 = vector.load %arg6[%c0_45, %c0_46] : memref<1x128xf32, #tpu.memory_space<vmem>>, vector<1x128xf32>
    %24 = arith.mulf %12, %12 : vector<256x128xf32>
    %cst_47 = arith.constant dense<0.000000e+00> : vector<128xf32>
    %25 = vector.multi_reduction <add>, %24, %cst_47 [0] : vector<256x128xf32> to vector<128xf32>
    %26 = vector.shape_cast %25 : vector<128xf32> to vector<1x128xf32>
    %27 = arith.addf %23, %26 : vector<1x128xf32>
    %c0_48 = arith.constant 0 : index
    %c0_49 = arith.constant 0 : index
    %28 = vector.load %arg6[%c0_48, %c0_49] : memref<1x128xf32, #tpu.memory_space<vmem>>, vector<1x128xf32>
    tpu.vector_store %arg6[%c0_48, %c0_49], %27 {strides = array<i32>} : memref<1x128xf32, #tpu.memory_space<vmem>>, vector<1x128xf32>,
    return
  }
  func.func @transform_0(%arg0: i32, %arg1: i32) -> (i32, i32, i32, i32) {
    %c0_i32 = arith.constant 0 : i32
    %c0_i32_0 = arith.constant 0 : i32
    %c0_i32_1 = arith.constant 0 : i32
    %c0_i32_2 = arith.constant 0 : i32
    return %arg1, %c0_i32, %c0_i32_0, %c0_i32_1 : i32, i32, i32, i32
  }
  func.func @transform_1(%arg0: i32, %arg1: i32) -> (i32, i32) {
    %c0_i32 = arith.constant 0 : i32
    %c0_i32_0 = arith.constant 0 : i32
    return %c0_i32, %arg0 : i32, i32
  }
  func.func @transform_2(%arg0: i32, %arg1: i32) -> (i32, i32, i32, i32) {
    %c0_i32 = arith.constant 0 : i32
    %c0_i32_0 = arith.constant 0 : i32
    %c0_i32_1 = arith.constant 0 : i32
    return %arg1, %c0_i32, %c0_i32_0, %arg0 : i32, i32, i32, i32
  }
  func.func @transform_3(%arg0: i32, %arg1: i32) -> (i32, i32) {
    %c0_i32 = arith.constant 0 : i32
    %c0_i32_0 = arith.constant 0 : i32
    return %c0_i32, %arg0 : i32, i32
  }
  func.func @transform_4(%arg0: i32, %arg1: i32) -> (i32, i32) {
    %c0_i32 = arith.constant 0 : i32
    %c0_i32_0 = arith.constant 0 : i32
    return %c0_i32, %arg0 : i32, i32
  }
}

</mosaic_0001>

<llo_original>
// kernel: tpu_custom_call.1
$region0: #{tpu_custom_call.1}
  #allocation0 [shape = 'u32[]', space=smem, size = 0x4, offset = 0x4, fixed_abs, tag = 'smem constant byte address 0x4 - core index']
  #allocation1 [shape = 'u32[144,128]{1,0:T(1,128)}', space=vmem, size = 0x12000, scoped, tag = 'internal scratch']
  %s0 = inlined_call_operand.vmem [shape: f32[2,18,18,128], index: 0, kind: input, shape index: {}]
  %s1 = inlined_call_operand.vmem [shape: f32[1152,128], index: 1, kind: input, shape index: {}]
  %s2 = inlined_call_operand.hbm [shape: f32[2,16,16,128], index: 2, kind: output, shape index: {0}]
  %s3 = inlined_call_operand.hbm [shape: f32[1,128], index: 3, kind: output, shape index: {1}]
  %s4 = inlined_call_operand.hbm [shape: f32[1,128], index: 4, kind: output, shape index: {2}]
  %5 = xla_tuple %s2, %s3, %s4
  %s6 = sld [smem:[#allocation0]]
  $region61: #{tpu_custom_call.1} parent=0
    _
  %s8 = ssub.s32 1, %s6
  %s9 = scalar_select 0, %s8, %s6
  $region1: #{tpu_custom_call.1} parent=0
    #allocation2 [shape = 'u8[262144]{0}', space=vmem, size = 0x40000, scoped, tag = 'output window, operand 0']
    #allocation3 [shape = 's32[2]{0}', space=sflag, size = 0x8, scoped, tag = 'scoped memory for tpu_custom_call.1']
    #allocation4 [shape = 'u8[512]{0}', space=vmem, size = 0x400, scoped, tag = 'output window, operand 1, single buffered']
    #allocation5 [shape = 's32[1]{0}', space=sflag, size = 0x4, scoped, tag = 'scoped memory for tpu_custom_call.1']
    #allocation6 [shape = 'u8[512]{0}', space=vmem, size = 0x400, scoped, tag = 'output window, operand 2, single buffered']
    %10 = vsyncpa [#allocation3], 0
    %s11 = scalar_lea.sflag [#allocation3], 1
    %12 = vsyncpa %s11, 0
    %13 = vsyncpa [#allocation5], 0
    loop: start=0, step=1, limit=4
    $region2: #{tpu_custom_call.1} parent=1 // loop_pre_header
      _
    $region3: #{tpu_custom_call.1} parent=1 // loop_header
      %s15 = sphi 0, %s19
      %p16 = scmp.ge.s32.totalorder %s15, 4
      %s22 = sphi 0, %s34
      %s23 = sphi 0, %s30
      %s24 = sphi 0, %s22
      %s25 = sphi 0, %s23
      %s26 = sphi 0, %s24
      %s27 = sphi 0, %s25
      %s37 = sphi 0, %s39
      %s40 = sphi 0, %s37
      %s41 = sphi 0, %s40
      %s57 = sphi 0, %s41
      %s63 = sphi 0, %s65
      %s66 = sphi 0, %s63
      %s67 = sphi 0, %s66
      %s83 = sphi 0, %s67
      %s91 = sphi 0, %s93
      %s94 = sphi 0, %s91
      %s95 = sphi 0, %s94
      %s111 = sphi 0, %s95
      %s117 = sphi 0, %s119
      %s120 = sphi 0, %s117
      %s121 = sphi 0, %s120
      %s137 = sphi 0, %s121
      %s143 = sphi 0, %s145
      %s146 = sphi 0, %s143
      %s147 = sphi 0, %s146
      %s163 = sphi 0, %s147
    $region4: #{tpu_custom_call.1} parent=1 // loop_header_branch
      %18 = sbr.rel (%p16) target = $region8
    $region5: #{tpu_custom_call.1} parent=1 // loop_body
      %s20 = ssub.s32 %s15, 1
      %s21 = ssub.s32 %s15, 2
      %s28 = sadd.s32 1, %s23
      %p29 = scmp.ge.s32.totalorder %s28, 2
      %s30 = scalar_select %p29, 0, %s28
      %s31 = sadd.s32 1, %s22
      %s32 = scalar_select %p29, %s31, %s22
      %p33 = scmp.ge.s32.totalorder %s32, 1
      %s34 = scalar_select %p33, 0, %s32
      %s35 = ssub.s32 %s23, %s30
      %p36 = scmp.eq.s32.totalorder %s35, 0
      %s38 = sadd.s32 %s37, 1
      %s39 = scalar_select %p36, %s37, %s38
      %p42 = pneg %p36
      %p43 = scmp.eq.s32.totalorder %s15, 1
      %p44 = por %p42, %p43
      %p45 = scmp.ne.s32.totalorder %s37, %s40
      %p46 = scmp.eq.s32.totalorder %s15, 0
      %p47 = por %p45, %p46
      %p48 = scmp.ne.s32.totalorder %s37, %s40
      %p49 = scmp.eq.s32.totalorder %s20, 1
      %p50 = por %p48, %p49
      %p51 = scmp.ne.s32.totalorder %s40, %s41
      %p52 = scmp.eq.s32.totalorder %s20, 0
      %p53 = por %p51, %p52
      %p54 = scmp.ne.s32.totalorder %s40, %s41
      %p55 = scmp.eq.s32.totalorder %s21, 1
      %p56 = por %p54, %p55
      %p58 = scmp.ne.s32.totalorder %s41, %s57
      %p59 = scmp.eq.s32.totalorder %s21, 0
      %p60 = por %p58, %p59
      %s61 = ssub.s32 %s22, %s34
      %p62 = scmp.eq.s32.totalorder %s61, 0
      %s64 = sadd.s32 %s63, 1
      %s65 = scalar_select %p62, %s63, %s64
      %p68 = pneg %p62
      %p69 = scmp.eq.s32.totalorder %s15, 1
      %p70 = por %p68, %p69
      %p71 = scmp.ne.s32.totalorder %s63, %s66
      %p72 = scmp.eq.s32.totalorder %s15, 0
      %p73 = por %p71, %p72
      %p74 = scmp.ne.s32.totalorder %s63, %s66
      %p75 = scmp.eq.s32.totalorder %s20, 1
      %p76 = por %p74, %p75
      %p77 = scmp.ne.s32.totalorder %s66, %s67
      %p78 = scmp.eq.s32.totalorder %s20, 0
      %p79 = por %p77, %p78
      %p80 = scmp.ne.s32.totalorder %s66, %s67
      %p81 = scmp.eq.s32.totalorder %s21, 1
      %p82 = por %p80, %p81
      %p84 = scmp.ne.s32.totalorder %s67, %s83
      %p85 = scmp.eq.s32.totalorder %s21, 0
      %p86 = por %p84, %p85
      %s87 = ssub.s32 %s23, %s30
      %s88 = ssub.s32 %s22, %s34
      %s89 = sor.u32 %s87, %s88
      %p90 = scmp.eq.s32.totalorder %s89, 0
      %s92 = sadd.s32 %s91, 1
      %s93 = scalar_select %p90, %s91, %s92
      %p96 = pneg %p90
      %p97 = scmp.eq.s32.totalorder %s15, 1
      %p98 = por %p96, %p97
      %p99 = scmp.ne.s32.totalorder %s91, %s94
      %p100 = scmp.eq.s32.totalorder %s15, 0
      %p101 = por %p99, %p100
      %p102 = scmp.ne.s32.totalorder %s91, %s94
      %p103 = scmp.eq.s32.totalorder %s20, 1
      %p104 = por %p102, %p103
      %p105 = scmp.ne.s32.totalorder %s94, %s95
      %p106 = scmp.eq.s32.totalorder %s20, 0
      %p107 = por %p105, %p106
      %p108 = scmp.ne.s32.totalorder %s94, %s95
      %p109 = scmp.eq.s32.totalorder %s21, 1
      %p110 = por %p108, %p109
      %p112 = scmp.ne.s32.totalorder %s95, %s111
      %p113 = scmp.eq.s32.totalorder %s21, 0
      %p114 = por %p112, %p113
      %s115 = ssub.s32 %s22, %s34
      %p116 = scmp.eq.s32.totalorder %s115, 0
      %s118 = sadd.s32 %s117, 1
      %s119 = scalar_select %p116, %s117, %s118
      %p122 = pneg %p116
      %p123 = scmp.eq.s32.totalorder %s15, 1
      %p124 = por %p122, %p123
      %p125 = scmp.ne.s32.totalorder %s117, %s120
      %p126 = scmp.eq.s32.totalorder %s15, 0
      %p127 = por %p125, %p126
      %p128 = scmp.ne.s32.totalorder %s117, %s120
      %p129 = scmp.eq.s32.totalorder %s20, 1
      %p130 = por %p128, %p129
      %p131 = scmp.ne.s32.totalorder %s120, %s121
      %p132 = scmp.eq.s32.totalorder %s20, 0
      %p133 = por %p131, %p132
      %p134 = scmp.ne.s32.totalorder %s120, %s121
      %p135 = scmp.eq.s32.totalorder %s21, 1
      %p136 = por %p134, %p135
      %p138 = scmp.ne.s32.totalorder %s121, %s137
      %p139 = scmp.eq.s32.totalorder %s21, 0
      %p140 = por %p138, %p139
      %s141 = ssub.s32 %s22, %s34
      %p142 = scmp.eq.s32.totalorder %s141, 0
      %s144 = sadd.s32 %s143, 1
      %s145 = scalar_select %p142, %s143, %s144
      %p148 = pneg %p142
      %p149 = scmp.eq.s32.totalorder %s15, 1
      %p150 = por %p148, %p149
      %p151 = scmp.ne.s32.totalorder %s143, %s146
      %p152 = scmp.eq.s32.totalorder %s15, 0
      %p153 = por %p151, %p152
      %p154 = scmp.ne.s32.totalorder %s143, %s146
      %p155 = scmp.eq.s32.totalorder %s20, 1
      %p156 = por %p154, %p155
      %p157 = scmp.ne.s32.totalorder %s146, %s147
      %p158 = scmp.eq.s32.totalorder %s20, 0
      %p159 = por %p157, %p158
      %p160 = scmp.ne.s32.totalorder %s146, %s147
      %p161 = scmp.eq.s32.totalorder %s21, 1
      %p162 = por %p160, %p161
      %p164 = scmp.ne.s32.totalorder %s147, %s163
      %p165 = scmp.eq.s32.totalorder %s21, 0
      %p166 = por %p164, %p165
      %p167 = scmp.le.s32.totalorder 1, %s15
      %p168 = scmp.lt.s32.totalorder %s15, 3
      %p169 = pnand %p167, %p168
      %p170 = pneg %p169
      // Predicated region
      $region9: #{tpu_custom_call.1} parent=5 // pred_check
        _
      $region10: #{tpu_custom_call.1} parent=5 // pred_check_branch
        %172 = sbr.rel (%p169) target = $region12
      $region11: #{tpu_custom_call.1} parent=5 // pred_region
        %s173 = ssub.s32 %s15, 1
        // Predicated region
        $region13: #{tpu_custom_call.1} parent=11 // pred_check
          %p174 = pneg %p79
        $region14: #{tpu_custom_call.1} parent=11 // pred_check_branch
          %176 = sbr.rel (%p174) target = $region16
        $region15: #{tpu_custom_call.1} parent=11 // pred_region
          %p177 = scmp.lt.s32.totalorder %s24, 0
          %s178 = scalar_select %p177, %s24, 0
          %s179 = smul.addr %s178, 8
          %s180 = scalar_lea.vmem %s1, %s179
        $region16: #{tpu_custom_call.1} parent=11 // pred_fallthru
          _
      $region12: #{tpu_custom_call.1} parent=5 // pred_fallthru
        _
      %p181 = scmp.lt.s32.totalorder %s15, 2
      // Predicated region
      $region17: #{tpu_custom_call.1} parent=5 // pred_check
        %p182 = pneg %p181
      $region18: #{tpu_custom_call.1} parent=5 // pred_check_branch
        %184 = sbr.rel (%p182) target = $region20
      $region19: #{tpu_custom_call.1} parent=5 // pred_region
        // Predicated region
        $region21: #{tpu_custom_call.1} parent=19 // pred_check
          %p185 = pneg %p47
        $region22: #{tpu_custom_call.1} parent=19 // pred_check_branch
          %187 = sbr.rel (%p185) target = $region24
        $region23: #{tpu_custom_call.1} parent=19 // pred_region
          %p188 = scmp.lt.s32.totalorder %s23, 1
          %s189 = scalar_select %p188, %s23, 1
          %s190 = smul.addr %s189, 54
          %s191 = smul.addr %s190, 8
          %s192 = scalar_lea.vmem %s0, %s191
        $region24: #{tpu_custom_call.1} parent=19 // pred_fallthru
          _
      $region20: #{tpu_custom_call.1} parent=5 // pred_fallthru
        _
      %p193 = scmp.le.s32.totalorder 1, %s15
      %p194 = scmp.lt.s32.totalorder %s15, 3
      %p195 = pnand %p193, %p194
      %p196 = pneg %p195
      // Predicated region
      $region25: #{tpu_custom_call.1} parent=5 // pred_check
        _
      $region26: #{tpu_custom_call.1} parent=5 // pred_check_branch
        %198 = sbr.rel (%p195) target = $region28
      $region27: #{tpu_custom_call.1} parent=5 // pred_region
        %s199 = ssub.s32 %s15, 1
        %p200 = scmp.lt.s32.totalorder %s25, 1
        %s201 = scalar_select %p200, %s25, 1
        %s202 = smul.addr %s201, 54
        %s203 = smul.addr %s202, 8
        %s204 = scalar_lea.vmem %s0, %s203
        %p205 = pneg %p53
        %p206 = pneg %p50
        %p207 = scmp.lt.s32.totalorder %s24, 0
        %s208 = scalar_select %p207, %s24, 0
        %s209 = smul.addr %s208, 8
        %s210 = scalar_lea.vmem %s1, %s209
        %p211 = pneg %p79
        %p212 = pneg %p76
        %p213 = pneg %p107
        %p214 = pneg %p104
        %s215 = sand.u32 %s94, 1
        %s216 = scalar_lea.sflag [#allocation3], %s215
        %s217 = sand.u32 %s94, 1
        %s218 = smul.addr %s217, 256
        %s219 = scalar_lea.vmem [#allocation2], %s218
        %p220 = pneg %p133
        %p221 = pneg %p130
        %p222 = pneg %p159
        %p223 = pneg %p156
        %p224 = scmp.lt.s32.totalorder %s25, 1
        %s225 = scalar_select %p224, %s25, 1
        %s226 = smul.addr %s225, 54
        %s227 = smul.addr %s226, 8
        %s228 = scalar_lea.vmem %s0, %s227
        %p229 = scmp.lt.s32.totalorder %s24, 0
        %s230 = scalar_select %p229, %s24, 0
        %s231 = smul.addr %s230, 8
        %s232 = scalar_lea.vmem %s1, %s231
        %v233 = vld [vmem:[%s228] sm:$0xff]
        %v234 = vld [vmem:[%s228 + $0x8] sm:$0xff]
        %v235 = vld [vmem:[%s228 + $0x18] sm:$0xff]
        %v236 = vld [vmem:[%s228 + $0x20] sm:$0xff]
        %v237 = vld [vmem:[%s228 + $0x30] sm:$0xff]
        %v238 = vld [vmem:[%s228 + $0x38] sm:$0xff]
        %v239 = vld [vmem:[%s228 + $0x48] sm:$0xff]
        %v240 = vld [vmem:[%s228 + $0x50] sm:$0xff]
        %v241 = vld [vmem:[%s228 + $0x60] sm:$0xff]
        %v242 = vld [vmem:[%s228 + $0x68] sm:$0xff]
        %v243 = vld [vmem:[%s228 + $0x78] sm:$0xff]
        %v244 = vld [vmem:[%s228 + $0x80] sm:$0xff]
        %v245 = vld [vmem:[%s228 + $0x90] sm:$0xff]
        %v246 = vld [vmem:[%s228 + $0x98] sm:$0xff]
        %v247 = vld [vmem:[%s228 + $0xa8] sm:$0xff]
        %v248 = vld [vmem:[%s228 + $0xb0] sm:$0xff]
        %v249 = vld [vmem:[%s228 + $0xc0] sm:$0xff]
        %v250 = vld [vmem:[%s228 + $0xc8] sm:$0xff]
        %v251 = vld [vmem:[%s228 + $0xd8] sm:$0xff]
        %v252 = vld [vmem:[%s228 + $0xe0] sm:$0xff]
        %v253 = vld [vmem:[%s228 + $0xf0] sm:$0xff]
        %v254 = vld [vmem:[%s228 + $0xf8] sm:$0xff]
        %v255 = vld [vmem:[%s228 + $0x108] sm:$0xff]
        %v256 = vld [vmem:[%s228 + $0x110] sm:$0xff]
        %v257 = vld [vmem:[%s228 + $0x120] sm:$0xff]
        %v258 = vld [vmem:[%s228 + $0x128] sm:$0xff]
        %v259 = vld [vmem:[%s228 + $0x138] sm:$0xff]
        %v260 = vld [vmem:[%s228 + $0x140] sm:$0xff]
        %v261 = vld [vmem:[%s228 + $0x150] sm:$0xff]
        %v262 = vld [vmem:[%s228 + $0x158] sm:$0xff]
        %v263 = vld [vmem:[%s228 + $0x168] sm:$0xff]
        %v264 = vld [vmem:[%s228 + $0x170] sm:$0xff]
        %v265 = vld [vmem:[%s228 + $0x1] sm:$0xff]
        %v266 = vld [vmem:[%s228 + $0x9] sm:$0xff]
        %v267 = vld [vmem:[%s228 + $0x19] sm:$0xff]
        %v268 = vld [vmem:[%s228 + $0x21] sm:$0xff]
        %v269 = vld [vmem:[%s228 + $0x31] sm:$0xff]
        %v270 = vld [vmem:[%s228 + $0x39] sm:$0xff]
        %v271 = vld [vmem:[%s228 + $0x49] sm:$0xff]
        %v272 = vld [vmem:[%s228 + $0x51] sm:$0xff]
        %v273 = vld [vmem:[%s228 + $0x61] sm:$0xff]
        %v274 = vld [vmem:[%s228 + $0x69] sm:$0xff]
        %v275 = vld [vmem:[%s228 + $0x79] sm:$0xff]
        %v276 = vld [vmem:[%s228 + $0x81] sm:$0xff]
        %v277 = vld [vmem:[%s228 + $0x91] sm:$0xff]
        %v278 = vld [vmem:[%s228 + $0x99] sm:$0xff]
        %v279 = vld [vmem:[%s228 + $0xa9] sm:$0xff]
        %v280 = vld [vmem:[%s228 + $0xb1] sm:$0xff]
        %v281 = vld [vmem:[%s228 + $0xc1] sm:$0xff]
        %v282 = vld [vmem:[%s228 + $0xc9] sm:$0xff]
        %v283 = vld [vmem:[%s228 + $0xd9] sm:$0xff]
        %v284 = vld [vmem:[%s228 + $0xe1] sm:$0xff]
        %v285 = vld [vmem:[%s228 + $0xf1] sm:$0xff]
        %v286 = vld [vmem:[%s228 + $0xf9] sm:$0xff]
        %v287 = vld [vmem:[%s228 + $0x109] sm:$0xff]
        %v288 = vld [vmem:[%s228 + $0x111] sm:$0xff]
        %v289 = vld [vmem:[%s228 + $0x121] sm:$0xff]
        %v290 = vld [vmem:[%s228 + $0x129] sm:$0xff]
        %v291 = vld [vmem:[%s228 + $0x139] sm:$0xff]
        %v292 = vld [vmem:[%s228 + $0x141] sm:$0xff]
        %v293 = vld [vmem:[%s228 + $0x151] sm:$0xff]
        %v294 = vld [vmem:[%s228 + $0x159] sm:$0xff]
        %v295 = vld [vmem:[%s228 + $0x169] sm:$0xff]
        %v296 = vld [vmem:[%s228 + $0x171] sm:$0xff]
        %v297 = vld [vmem:[%s228 + $0x2] sm:$0xff]
        %v298 = vld [vmem:[%s228 + $0xa] sm:$0xff]
        %v299 = vld [vmem:[%s228 + $0x1a] sm:$0xff]
        %v300 = vld [vmem:[%s228 + $0x22] sm:$0xff]
        %v301 = vld [vmem:[%s228 + $0x32] sm:$0xff]
        %v302 = vld [vmem:[%s228 + $0x3a] sm:$0xff]
        %v303 = vld [vmem:[%s228 + $0x4a] sm:$0xff]
        %v304 = vld [vmem:[%s228 + $0x52] sm:$0xff]
        %v305 = vld [vmem:[%s228 + $0x62] sm:$0xff]
        %v306 = vld [vmem:[%s228 + $0x6a] sm:$0xff]
        %v307 = vld [vmem:[%s228 + $0x7a] sm:$0xff]
        %v308 = vld [vmem:[%s228 + $0x82] sm:$0xff]
        %v309 = vld [vmem:[%s228 + $0x92] sm:$0xff]
        %v310 = vld [vmem:[%s228 + $0x9a] sm:$0xff]
        %v311 = vld [vmem:[%s228 + $0xaa] sm:$0xff]
        %v312 = vld [vmem:[%s228 + $0xb2] sm:$0xff]
        %v313 = vld [vmem:[%s228 + $0xc2] sm:$0xff]
        %v314 = vld [vmem:[%s228 + $0xca] sm:$0xff]
        %v315 = vld [vmem:[%s228 + $0xda] sm:$0xff]
        %v316 = vld [vmem:[%s228 + $0xe2] sm:$0xff]
        %v317 = vld [vmem:[%s228 + $0xf2] sm:$0xff]
        %v318 = vld [vmem:[%s228 + $0xfa] sm:$0xff]
        %v319 = vld [vmem:[%s228 + $0x10a] sm:$0xff]
        %v320 = vld [vmem:[%s228 + $0x112] sm:$0xff]
        %v321 = vld [vmem:[%s228 + $0x122] sm:$0xff]
        %v322 = vld [vmem:[%s228 + $0x12a] sm:$0xff]
        %v323 = vld [vmem:[%s228 + $0x13a] sm:$0xff]
        %v324 = vld [vmem:[%s228 + $0x142] sm:$0xff]
        %v325 = vld [vmem:[%s228 + $0x152] sm:$0xff]
        %v326 = vld [vmem:[%s228 + $0x15a] sm:$0xff]
        %v327 = vld [vmem:[%s228 + $0x16a] sm:$0xff]
        %v328 = vld [vmem:[%s228 + $0x172] sm:$0xff]
        %s329 = scalar_lea.vmem %s228, 24
        %v330 = vld [vmem:[%s329] sm:$0xff]
        %v331 = vld [vmem:[%s329 + $0x8] sm:$0xff]
        %v332 = vld [vmem:[%s329 + $0x18] sm:$0xff]
        %v333 = vld [vmem:[%s329 + $0x20] sm:$0xff]
        %v334 = vld [vmem:[%s329 + $0x30] sm:$0xff]
        %v335 = vld [vmem:[%s329 + $0x38] sm:$0xff]
        %v336 = vld [vmem:[%s329 + $0x48] sm:$0xff]
        %v337 = vld [vmem:[%s329 + $0x50] sm:$0xff]
        %v338 = vld [vmem:[%s329 + $0x60] sm:$0xff]
        %v339 = vld [vmem:[%s329 + $0x68] sm:$0xff]
        %v340 = vld [vmem:[%s329 + $0x78] sm:$0xff]
        %v341 = vld [vmem:[%s329 + $0x80] sm:$0xff]
        %v342 = vld [vmem:[%s329 + $0x90] sm:$0xff]
        %v343 = vld [vmem:[%s329 + $0x98] sm:$0xff]
        %v344 = vld [vmem:[%s329 + $0xa8] sm:$0xff]
        %v345 = vld [vmem:[%s329 + $0xb0] sm:$0xff]
        %v346 = vld [vmem:[%s329 + $0xc0] sm:$0xff]
        %v347 = vld [vmem:[%s329 + $0xc8] sm:$0xff]
        %v348 = vld [vmem:[%s329 + $0xd8] sm:$0xff]
        %v349 = vld [vmem:[%s329 + $0xe0] sm:$0xff]
        %v350 = vld [vmem:[%s329 + $0xf0] sm:$0xff]
        %v351 = vld [vmem:[%s329 + $0xf8] sm:$0xff]
        %v352 = vld [vmem:[%s329 + $0x108] sm:$0xff]
        %v353 = vld [vmem:[%s329 + $0x110] sm:$0xff]
        %v354 = vld [vmem:[%s329 + $0x120] sm:$0xff]
        %v355 = vld [vmem:[%s329 + $0x128] sm:$0xff]
        %v356 = vld [vmem:[%s329 + $0x138] sm:$0xff]
        %v357 = vld [vmem:[%s329 + $0x140] sm:$0xff]
        %v358 = vld [vmem:[%s329 + $0x150] sm:$0xff]
        %v359 = vld [vmem:[%s329 + $0x158] sm:$0xff]
        %v360 = vld [vmem:[%s329 + $0x168] sm:$0xff]
        %v361 = vld [vmem:[%s329 + $0x170] sm:$0xff]
        %v362 = vld [vmem:[%s329 + $0x1] sm:$0xff]
        %v363 = vld [vmem:[%s329 + $0x9] sm:$0xff]
        %v364 = vld [vmem:[%s329 + $0x19] sm:$0xff]
        %v365 = vld [vmem:[%s329 + $0x21] sm:$0xff]
        %v366 = vld [vmem:[%s329 + $0x31] sm:$0xff]
        %v367 = vld [vmem:[%s329 + $0x39] sm:$0xff]
        %v368 = vld [vmem:[%s329 + $0x49] sm:$0xff]
        %v369 = vld [vmem:[%s329 + $0x51] sm:$0xff]
        %v370 = vld [vmem:[%s329 + $0x61] sm:$0xff]
        %v371 = vld [vmem:[%s329 + $0x69] sm:$0xff]
        %v372 = vld [vmem:[%s329 + $0x79] sm:$0xff]
        %v373 = vld [vmem:[%s329 + $0x81] sm:$0xff]
        %v374 = vld [vmem:[%s329 + $0x91] sm:$0xff]
        %v375 = vld [vmem:[%s329 + $0x99] sm:$0xff]
        %v376 = vld [vmem:[%s329 + $0xa9] sm:$0xff]
        %v377 = vld [vmem:[%s329 + $0xb1] sm:$0xff]
        %v378 = vld [vmem:[%s329 + $0xc1] sm:$0xff]
        %v379 = vld [vmem:[%s329 + $0xc9] sm:$0xff]
        %v380 = vld [vmem:[%s329 + $0xd9] sm:$0xff]
        %v381 = vld [vmem:[%s329 + $0xe1] sm:$0xff]
        %v382 = vld [vmem:[%s329 + $0xf1] sm:$0xff]
        %v383 = vld [vmem:[%s329 + $0xf9] sm:$0xff]
        %v384 = vld [vmem:[%s329 + $0x109] sm:$0xff]
        %v385 = vld [vmem:[%s329 + $0x111] sm:$0xff]
        %v386 = vld [vmem:[%s329 + $0x121] sm:$0xff]
        %v387 = vld [vmem:[%s329 + $0x129] sm:$0xff]
        %v388 = vld [vmem:[%s329 + $0x139] sm:$0xff]
        %v389 = vld [vmem:[%s329 + $0x141] sm:$0xff]
        %v390 = vld [vmem:[%s329 + $0x151] sm:$0xff]
        %v391 = vld [vmem:[%s329 + $0x159] sm:$0xff]
        %v392 = vld [vmem:[%s329 + $0x169] sm:$0xff]
        %v393 = vld [vmem:[%s329 + $0x171] sm:$0xff]
        %v394 = vld [vmem:[%s329 + $0x2] sm:$0xff]
        %v395 = vld [vmem:[%s329 + $0xa] sm:$0xff]
        %v396 = vld [vmem:[%s329 + $0x1a] sm:$0xff]
        %v397 = vld [vmem:[%s329 + $0x22] sm:$0xff]
        %v398 = vld [vmem:[%s329 + $0x32] sm:$0xff]
        %v399 = vld [vmem:[%s329 + $0x3a] sm:$0xff]
        %v400 = vld [vmem:[%s329 + $0x4a] sm:$0xff]
        %v401 = vld [vmem:[%s329 + $0x52] sm:$0xff]
        %v402 = vld [vmem:[%s329 + $0x62] sm:$0xff]
        %v403 = vld [vmem:[%s329 + $0x6a] sm:$0xff]
        %v404 = vld [vmem:[%s329 + $0x7a] sm:$0xff]
        %v405 = vld [vmem:[%s329 + $0x82] sm:$0xff]
        %v406 = vld [vmem:[%s329 + $0x92] sm:$0xff]
        %v407 = vld [vmem:[%s329 + $0x9a] sm:$0xff]
        %v408 = vld [vmem:[%s329 + $0xaa] sm:$0xff]
        %v409 = vld [vmem:[%s329 + $0xb2] sm:$0xff]
        %v410 = vld [vmem:[%s329 + $0xc2] sm:$0xff]
        %v411 = vld [vmem:[%s329 + $0xca] sm:$0xff]
        %v412 = vld [vmem:[%s329 + $0xda] sm:$0xff]
        %v413 = vld [vmem:[%s329 + $0xe2] sm:$0xff]
        %v414 = vld [vmem:[%s329 + $0xf2] sm:$0xff]
        %v415 = vld [vmem:[%s329 + $0xfa] sm:$0xff]
        %v416 = vld [vmem:[%s329 + $0x10a] sm:$0xff]
        %v417 = vld [vmem:[%s329 + $0x112] sm:$0xff]
        %v418 = vld [vmem:[%s329 + $0x122] sm:$0xff]
        %v419 = vld [vmem:[%s329 + $0x12a] sm:$0xff]
        %v420 = vld [vmem:[%s329 + $0x13a] sm:$0xff]
        %v421 = vld [vmem:[%s329 + $0x142] sm:$0xff]
        %v422 = vld [vmem:[%s329 + $0x152] sm:$0xff]
        %v423 = vld [vmem:[%s329 + $0x15a] sm:$0xff]
        %v424 = vld [vmem:[%s329 + $0x16a] sm:$0xff]
        %v425 = vld [vmem:[%s329 + $0x172] sm:$0xff]
        %s426 = scalar_lea.vmem %s228, 48
        %v427 = vld [vmem:[%s426] sm:$0xff]
        %v428 = vld [vmem:[%s426 + $0x8] sm:$0xff]
        %v429 = vld [vmem:[%s426 + $0x18] sm:$0xff]
        %v430 = vld [vmem:[%s426 + $0x20] sm:$0xff]
        %v431 = vld [vmem:[%s426 + $0x30] sm:$0xff]
        %v432 = vld [vmem:[%s426 + $0x38] sm:$0xff]
        %v433 = vld [vmem:[%s426 + $0x48] sm:$0xff]
        %v434 = vld [vmem:[%s426 + $0x50] sm:$0xff]
        %v435 = vld [vmem:[%s426 + $0x60] sm:$0xff]
        %v436 = vld [vmem:[%s426 + $0x68] sm:$0xff]
        %v437 = vld [vmem:[%s426 + $0x78] sm:$0xff]
        %v438 = vld [vmem:[%s426 + $0x80] sm:$0xff]
        %v439 = vld [vmem:[%s426 + $0x90] sm:$0xff]
        %v440 = vld [vmem:[%s426 + $0x98] sm:$0xff]
        %v441 = vld [vmem:[%s426 + $0xa8] sm:$0xff]
        %v442 = vld [vmem:[%s426 + $0xb0] sm:$0xff]
        %v443 = vld [vmem:[%s426 + $0xc0] sm:$0xff]
        %v444 = vld [vmem:[%s426 + $0xc8] sm:$0xff]
        %v445 = vld [vmem:[%s426 + $0xd8] sm:$0xff]
        %v446 = vld [vmem:[%s426 + $0xe0] sm:$0xff]
        %v447 = vld [vmem:[%s426 + $0xf0] sm:$0xff]
        %v448 = vld [vmem:[%s426 + $0xf8] sm:$0xff]
        %v449 = vld [vmem:[%s426 + $0x108] sm:$0xff]
        %v450 = vld [vmem:[%s426 + $0x110] sm:$0xff]
        %v451 = vld [vmem:[%s426 + $0x120] sm:$0xff]
        %v452 = vld [vmem:[%s426 + $0x128] sm:$0xff]
        %v453 = vld [vmem:[%s426 + $0x138] sm:$0xff]
        %v454 = vld [vmem:[%s426 + $0x140] sm:$0xff]
        %v455 = vld [vmem:[%s426 + $0x150] sm:$0xff]
        %v456 = vld [vmem:[%s426 + $0x158] sm:$0xff]
        %v457 = vld [vmem:[%s426 + $0x168] sm:$0xff]
        %v458 = vld [vmem:[%s426 + $0x170] sm:$0xff]
        %v459 = vld [vmem:[%s426 + $0x1] sm:$0xff]
        %v460 = vld [vmem:[%s426 + $0x9] sm:$0xff]
        %v461 = vld [vmem:[%s426 + $0x19] sm:$0xff]
        %v462 = vld [vmem:[%s426 + $0x21] sm:$0xff]
        %v463 = vld [vmem:[%s426 + $0x31] sm:$0xff]
        %v464 = vld [vmem:[%s426 + $0x39] sm:$0xff]
        %v465 = vld [vmem:[%s426 + $0x49] sm:$0xff]
        %v466 = vld [vmem:[%s426 + $0x51] sm:$0xff]
        %v467 = vld [vmem:[%s426 + $0x61] sm:$0xff]
        %v468 = vld [vmem:[%s426 + $0x69] sm:$0xff]
        %v469 = vld [vmem:[%s426 + $0x79] sm:$0xff]
        %v470 = vld [vmem:[%s426 + $0x81] sm:$0xff]
        %v471 = vld [vmem:[%s426 + $0x91] sm:$0xff]
        %v472 = vld [vmem:[%s426 + $0x99] sm:$0xff]
        %v473 = vld [vmem:[%s426 + $0xa9] sm:$0xff]
        %v474 = vld [vmem:[%s426 + $0xb1] sm:$0xff]
        %v475 = vld [vmem:[%s426 + $0xc1] sm:$0xff]
        %v476 = vld [vmem:[%s426 + $0xc9] sm:$0xff]
        %v477 = vld [vmem:[%s426 + $0xd9] sm:$0xff]
        %v478 = vld [vmem:[%s426 + $0xe1] sm:$0xff]
        %v479 = vld [vmem:[%s426 + $0xf1] sm:$0xff]
        %v480 = vld [vmem:[%s426 + $0xf9] sm:$0xff]
        %v481 = vld [vmem:[%s426 + $0x109] sm:$0xff]
        %v482 = vld [vmem:[%s426 + $0x111] sm:$0xff]
        %v483 = vld [vmem:[%s426 + $0x121] sm:$0xff]
        %v484 = vld [vmem:[%s426 + $0x129] sm:$0xff]
        %v485 = vld [vmem:[%s426 + $0x139] sm:$0xff]
        %v486 = vld [vmem:[%s426 + $0x141] sm:$0xff]
        %v487 = vld [vmem:[%s426 + $0x151] sm:$0xff]
        %v488 = vld [vmem:[%s426 + $0x159] sm:$0xff]
        %v489 = vld [vmem:[%s426 + $0x169] sm:$0xff]
        %v490 = vld [vmem:[%s426 + $0x171] sm:$0xff]
        %v491 = vld [vmem:[%s426 + $0x2] sm:$0xff]
        %v492 = vld [vmem:[%s426 + $0xa] sm:$0xff]
        %v493 = vld [vmem:[%s426 + $0x1a] sm:$0xff]
        %v494 = vld [vmem:[%s426 + $0x22] sm:$0xff]
        %v495 = vld [vmem:[%s426 + $0x32] sm:$0xff]
        %v496 = vld [vmem:[%s426 + $0x3a] sm:$0xff]
        %v497 = vld [vmem:[%s426 + $0x4a] sm:$0xff]
        %v498 = vld [vmem:[%s426 + $0x52] sm:$0xff]
        %v499 = vld [vmem:[%s426 + $0x62] sm:$0xff]
        %v500 = vld [vmem:[%s426 + $0x6a] sm:$0xff]
        %v501 = vld [vmem:[%s426 + $0x7a] sm:$0xff]
        %v502 = vld [vmem:[%s426 + $0x82] sm:$0xff]
        %v503 = vld [vmem:[%s426 + $0x92] sm:$0xff]
        %v504 = vld [vmem:[%s426 + $0x9a] sm:$0xff]
        %v505 = vld [vmem:[%s426 + $0xaa] sm:$0xff]
        %v506 = vld [vmem:[%s426 + $0xb2] sm:$0xff]
        %v507 = vld [vmem:[%s426 + $0xc2] sm:$0xff]
        %v508 = vld [vmem:[%s426 + $0xca] sm:$0xff]
        %v509 = vld [vmem:[%s426 + $0xda] sm:$0xff]
        %v510 = vld [vmem:[%s426 + $0xe2] sm:$0xff]
        %v511 = vld [vmem:[%s426 + $0xf2] sm:$0xff]
        %v512 = vld [vmem:[%s426 + $0xfa] sm:$0xff]
        %v513 = vld [vmem:[%s426 + $0x10a] sm:$0xff]
        %v514 = vld [vmem:[%s426 + $0x112] sm:$0xff]
        %v515 = vld [vmem:[%s426 + $0x122] sm:$0xff]
        %v516 = vld [vmem:[%s426 + $0x12a] sm:$0xff]
        %v517 = vld [vmem:[%s426 + $0x13a] sm:$0xff]
        %v518 = vld [vmem:[%s426 + $0x142] sm:$0xff]
        %v519 = vld [vmem:[%s426 + $0x152] sm:$0xff]
        %v520 = vld [vmem:[%s426 + $0x15a] sm:$0xff]
        %v521 = vld [vmem:[%s426 + $0x16a] sm:$0xff]
        %v522 = vld [vmem:[%s426 + $0x172] sm:$0xff]
        %v523 = vld [vmem:[%s232] sm:$0xff]
        %v524 = vld [vmem:[%s232 + $0x8] sm:$0xff]
        %v525 = vld [vmem:[%s232 + $0x10] sm:$0xff]
        %v526 = vld [vmem:[%s232 + $0x18] sm:$0xff]
        %v527 = vld [vmem:[%s232 + $0x20] sm:$0xff]
        %v528 = vld [vmem:[%s232 + $0x28] sm:$0xff]
        %v529 = vld [vmem:[%s232 + $0x30] sm:$0xff]
        %v530 = vld [vmem:[%s232 + $0x38] sm:$0xff]
        %v531 = vld [vmem:[%s232 + $0x40] sm:$0xff]
        %v532 = vld [vmem:[%s232 + $0x48] sm:$0xff]
        %v533 = vld [vmem:[%s232 + $0x50] sm:$0xff]
        %v534 = vld [vmem:[%s232 + $0x58] sm:$0xff]
        %v535 = vld [vmem:[%s232 + $0x60] sm:$0xff]
        %v536 = vld [vmem:[%s232 + $0x68] sm:$0xff]
        %v537 = vld [vmem:[%s232 + $0x70] sm:$0xff]
        %v538 = vld [vmem:[%s232 + $0x78] sm:$0xff]
        %v539 = vld [vmem:[%s232 + $0x80] sm:$0xff]
        %v540 = vld [vmem:[%s232 + $0x88] sm:$0xff]
        %v541 = vld [vmem:[%s232 + $0x90] sm:$0xff]
        %v542 = vld [vmem:[%s232 + $0x98] sm:$0xff]
        %v543 = vld [vmem:[%s232 + $0xa0] sm:$0xff]
        %v544 = vld [vmem:[%s232 + $0xa8] sm:$0xff]
        %v545 = vld [vmem:[%s232 + $0xb0] sm:$0xff]
        %v546 = vld [vmem:[%s232 + $0xb8] sm:$0xff]
        %v547 = vld [vmem:[%s232 + $0xc0] sm:$0xff]
        %v548 = vld [vmem:[%s232 + $0xc8] sm:$0xff]
        %v549 = vld [vmem:[%s232 + $0xd0] sm:$0xff]
        %v550 = vld [vmem:[%s232 + $0xd8] sm:$0xff]
        %v551 = vld [vmem:[%s232 + $0xe0] sm:$0xff]
        %v552 = vld [vmem:[%s232 + $0xe8] sm:$0xff]
        %v553 = vld [vmem:[%s232 + $0xf0] sm:$0xff]
        %v554 = vld [vmem:[%s232 + $0xf8] sm:$0xff]
        %v555 = vld [vmem:[%s232 + $0x100] sm:$0xff]
        %v556 = vld [vmem:[%s232 + $0x108] sm:$0xff]
        %v557 = vld [vmem:[%s232 + $0x110] sm:$0xff]
        %v558 = vld [vmem:[%s232 + $0x118] sm:$0xff]
        %v559 = vld [vmem:[%s232 + $0x120] sm:$0xff]
        %v560 = vld [vmem:[%s232 + $0x128] sm:$0xff]
        %v561 = vld [vmem:[%s232 + $0x130] sm:$0xff]
        %v562 = vld [vmem:[%s232 + $0x138] sm:$0xff]
        %v563 = vld [vmem:[%s232 + $0x140] sm:$0xff]
        %v564 = vld [vmem:[%s232 + $0x148] sm:$0xff]
        %v565 = vld [vmem:[%s232 + $0x150] sm:$0xff]
        %v566 = vld [vmem:[%s232 + $0x158] sm:$0xff]
        %v567 = vld [vmem:[%s232 + $0x160] sm:$0xff]
        %v568 = vld [vmem:[%s232 + $0x168] sm:$0xff]
        %v569 = vld [vmem:[%s232 + $0x170] sm:$0xff]
        %v570 = vld [vmem:[%s232 + $0x178] sm:$0xff]
        %v571 = vld [vmem:[%s232 + $0x180] sm:$0xff]
        %v572 = vld [vmem:[%s232 + $0x188] sm:$0xff]
        %v573 = vld [vmem:[%s232 + $0x190] sm:$0xff]
        %v574 = vld [vmem:[%s232 + $0x198] sm:$0xff]
        %v575 = vld [vmem:[%s232 + $0x1a0] sm:$0xff]
        %v576 = vld [vmem:[%s232 + $0x1a8] sm:$0xff]
        %v577 = vld [vmem:[%s232 + $0x1b0] sm:$0xff]
        %v578 = vld [vmem:[%s232 + $0x1b8] sm:$0xff]
        %v579 = vld [vmem:[%s232 + $0x1c0] sm:$0xff]
        %v580 = vld [vmem:[%s232 + $0x1c8] sm:$0xff]
        %v581 = vld [vmem:[%s232 + $0x1d0] sm:$0xff]
        %v582 = vld [vmem:[%s232 + $0x1d8] sm:$0xff]
        %v583 = vld [vmem:[%s232 + $0x1e0] sm:$0xff]
        %v584 = vld [vmem:[%s232 + $0x1e8] sm:$0xff]
        %v585 = vld [vmem:[%s232 + $0x1f0] sm:$0xff]
        %v586 = vld [vmem:[%s232 + $0x1f8] sm:$0xff]
        %v587 = vld [vmem:[%s232 + $0x200] sm:$0xff]
        %v588 = vld [vmem:[%s232 + $0x208] sm:$0xff]
        %v589 = vld [vmem:[%s232 + $0x210] sm:$0xff]
        %v590 = vld [vmem:[%s232 + $0x218] sm:$0xff]
        %v591 = vld [vmem:[%s232 + $0x220] sm:$0xff]
        %v592 = vld [vmem:[%s232 + $0x228] sm:$0xff]
        %v593 = vld [vmem:[%s232 + $0x230] sm:$0xff]
        %v594 = vld [vmem:[%s232 + $0x238] sm:$0xff]
        %v595 = vld [vmem:[%s232 + $0x240] sm:$0xff]
        %v596 = vld [vmem:[%s232 + $0x248] sm:$0xff]
        %v597 = vld [vmem:[%s232 + $0x250] sm:$0xff]
        %v598 = vld [vmem:[%s232 + $0x258] sm:$0xff]
        %v599 = vld [vmem:[%s232 + $0x260] sm:$0xff]
        %v600 = vld [vmem:[%s232 + $0x268] sm:$0xff]
        %v601 = vld [vmem:[%s232 + $0x270] sm:$0xff]
        %v602 = vld [vmem:[%s232 + $0x278] sm:$0xff]
        %v603 = vld [vmem:[%s232 + $0x280] sm:$0xff]
        %v604 = vld [vmem:[%s232 + $0x288] sm:$0xff]
        %v605 = vld [vmem:[%s232 + $0x290] sm:$0xff]
        %v606 = vld [vmem:[%s232 + $0x298] sm:$0xff]
        %v607 = vld [vmem:[%s232 + $0x2a0] sm:$0xff]
        %v608 = vld [vmem:[%s232 + $0x2a8] sm:$0xff]
        %v609 = vld [vmem:[%s232 + $0x2b0] sm:$0xff]
        %v610 = vld [vmem:[%s232 + $0x2b8] sm:$0xff]
        %v611 = vld [vmem:[%s232 + $0x2c0] sm:$0xff]
        %v612 = vld [vmem:[%s232 + $0x2c8] sm:$0xff]
        %v613 = vld [vmem:[%s232 + $0x2d0] sm:$0xff]
        %v614 = vld [vmem:[%s232 + $0x2d8] sm:$0xff]
        %v615 = vld [vmem:[%s232 + $0x2e0] sm:$0xff]
        %v616 = vld [vmem:[%s232 + $0x2e8] sm:$0xff]
        %v617 = vld [vmem:[%s232 + $0x2f0] sm:$0xff]
        %v618 = vld [vmem:[%s232 + $0x2f8] sm:$0xff]
        %v619 = vld [vmem:[%s232 + $0x300] sm:$0xff]
        %v620 = vld [vmem:[%s232 + $0x308] sm:$0xff]
        %v621 = vld [vmem:[%s232 + $0x310] sm:$0xff]
        %v622 = vld [vmem:[%s232 + $0x318] sm:$0xff]
        %v623 = vld [vmem:[%s232 + $0x320] sm:$0xff]
        %v624 = vld [vmem:[%s232 + $0x328] sm:$0xff]
        %v625 = vld [vmem:[%s232 + $0x330] sm:$0xff]
        %v626 = vld [vmem:[%s232 + $0x338] sm:$0xff]
        %v627 = vld [vmem:[%s232 + $0x340] sm:$0xff]
        %v628 = vld [vmem:[%s232 + $0x348] sm:$0xff]
        %v629 = vld [vmem:[%s232 + $0x350] sm:$0xff]
        %v630 = vld [vmem:[%s232 + $0x358] sm:$0xff]
        %v631 = vld [vmem:[%s232 + $0x360] sm:$0xff]
        %v632 = vld [vmem:[%s232 + $0x368] sm:$0xff]
        %v633 = vld [vmem:[%s232 + $0x370] sm:$0xff]
        %v634 = vld [vmem:[%s232 + $0x378] sm:$0xff]
        %v635 = vld [vmem:[%s232 + $0x380] sm:$0xff]
        %v636 = vld [vmem:[%s232 + $0x388] sm:$0xff]
        %v637 = vld [vmem:[%s232 + $0x390] sm:$0xff]
        %v638 = vld [vmem:[%s232 + $0x398] sm:$0xff]
        %v639 = vld [vmem:[%s232 + $0x3a0] sm:$0xff]
        %v640 = vld [vmem:[%s232 + $0x3a8] sm:$0xff]
        %v641 = vld [vmem:[%s232 + $0x3b0] sm:$0xff]
        %v642 = vld [vmem:[%s232 + $0x3b8] sm:$0xff]
        %v643 = vld [vmem:[%s232 + $0x3c0] sm:$0xff]
        %v644 = vld [vmem:[%s232 + $0x3c8] sm:$0xff]
        %v645 = vld [vmem:[%s232 + $0x3d0] sm:$0xff]
        %v646 = vld [vmem:[%s232 + $0x3d8] sm:$0xff]
        %v647 = vld [vmem:[%s232 + $0x3e0] sm:$0xff]
        %v648 = vld [vmem:[%s232 + $0x3e8] sm:$0xff]
        %v649 = vld [vmem:[%s232 + $0x3f0] sm:$0xff]
        %v650 = vld [vmem:[%s232 + $0x3f8] sm:$0xff]
        %v651 = vld [vmem:[%s232 + $0x400] sm:$0xff]
        %v652 = vld [vmem:[%s232 + $0x408] sm:$0xff]
        %v653 = vld [vmem:[%s232 + $0x410] sm:$0xff]
        %v654 = vld [vmem:[%s232 + $0x418] sm:$0xff]
        %v655 = vld [vmem:[%s232 + $0x420] sm:$0xff]
        %v656 = vld [vmem:[%s232 + $0x428] sm:$0xff]
        %v657 = vld [vmem:[%s232 + $0x430] sm:$0xff]
        %v658 = vld [vmem:[%s232 + $0x438] sm:$0xff]
        %v659 = vld [vmem:[%s232 + $0x440] sm:$0xff]
        %v660 = vld [vmem:[%s232 + $0x448] sm:$0xff]
        %v661 = vld [vmem:[%s232 + $0x450] sm:$0xff]
        %v662 = vld [vmem:[%s232 + $0x458] sm:$0xff]
        %v663 = vld [vmem:[%s232 + $0x460] sm:$0xff]
        %v664 = vld [vmem:[%s232 + $0x468] sm:$0xff]
        %v665 = vld [vmem:[%s232 + $0x470] sm:$0xff]
        %v666 = vld [vmem:[%s232 + $0x478] sm:$0xff]
        %667 = vmatprep.subr.mxu0 0.0
        %668 = vmatpush1.msra.mxu0 %v523
        %669 = vmatprep.subr.mxu0 0.0
        %670 = vmatpush1.msra.mxu0 %v524
        %671 = vmatprep.subr.mxu0 0.0
        %672 = vmatpush1.msra.mxu0 %v525
        %673 = vmatprep.subr.mxu0 0.0
        %674 = vmatpush1.msra.mxu0 %v526
        %675 = vmatprep.subr.mxu0 0.0
        %676 = vmatpush1.msra.mxu0 %v527
        %677 = vmatprep.subr.mxu0 0.0
        %678 = vmatpush1.msra.mxu0 %v528
        %679 = vmatprep.subr.mxu0 0.0
        %680 = vmatpush1.msra.mxu0 %v529
        %681 = vmatprep.subr.mxu0 0.0
        %682 = vmatpush1.msra.mxu0 %v530
        %683 = vmatprep.subr.mxu0 0.0
        %684 = vmatpush1.msra.mxu0 %v531
        %685 = vmatprep.subr.mxu0 0.0
        %686 = vmatpush1.msra.mxu0 %v532
        %687 = vmatprep.subr.mxu0 0.0
        %688 = vmatpush1.msra.mxu0 %v533
        %689 = vmatprep.subr.mxu0 0.0
        %690 = vmatpush1.msra.mxu0 %v534
        %691 = vmatprep.subr.mxu0 0.0
        %692 = vmatpush1.msra.mxu0 %v535
        %693 = vmatprep.subr.mxu0 0.0
        %694 = vmatpush1.msra.mxu0 %v536
        %695 = vmatprep.subr.mxu0 0.0
        %696 = vmatpush1.msra.mxu0 %v537
        %697 = vmatprep.subr.mxu0 0.0
        %698 = vmatpush1.msra.mxu0 %v538
        %699 = vmatprep.subr.mxu0 0.0
        %700 = vmatpush1.msra.mxu0 %v539
        %701 = vmatprep.subr.mxu0 0.0
        %702 = vmatpush1.msra.mxu0 %v540
        %703 = vmatprep.subr.mxu0 0.0
        %704 = vmatpush1.msra.mxu0 %v541
        %705 = vmatprep.subr.mxu0 0.0
        %706 = vmatpush1.msra.mxu0 %v542
        %707 = vmatprep.subr.mxu0 0.0
        %708 = vmatpush1.msra.mxu0 %v543
        %709 = vmatprep.subr.mxu0 0.0
        %710 = vmatpush1.msra.mxu0 %v544
        %711 = vmatprep.subr.mxu0 0.0
        %712 = vmatpush1.msra.mxu0 %v545
        %713 = vmatprep.subr.mxu0 0.0
        %714 = vmatpush1.msra.mxu0 %v546
        %715 = vmatprep.subr.mxu0 0.0
        %716 = vmatpush1.msra.mxu0 %v547
        %717 = vmatprep.subr.mxu0 0.0
        %718 = vmatpush1.msra.mxu0 %v548
        %719 = vmatprep.subr.mxu0 0.0
        %720 = vmatpush1.msra.mxu0 %v549
        %721 = vmatprep.subr.mxu0 0.0
        %722 = vmatpush1.msra.mxu0 %v550
        %723 = vmatprep.subr.mxu0 0.0
        %724 = vmatpush1.msra.mxu0 %v551
        %725 = vmatprep.subr.mxu0 0.0
        %726 = vmatpush1.msra.mxu0 %v552
        %727 = vmatprep.subr.mxu0 0.0
        %728 = vmatpush1.msra.mxu0 %v553
        %729 = vmatprep.subr.mxu0 0.0
        %730 = vmatpush1.msra.mxu0 %v554
        %731 = vmatprep.mubr.f32.mxu0 %v265
        %732 = vmatmul.mubr.f32.gmra.mrb[0].mxu0 %v233
        %v733 = vpop.f32.mrb[0].mxu0
        %v734 = vadd.f32 0.0, %v733
        %v735 = vpop.f32.mrb[0].mxu0
        %736 = vmatprep.mubr.f32.mxu0 %v266
        %737 = vmatmul.mubr.f32.gmra.mrb[0].mxu0 %v234
        %v738 = vpop.f32.mrb[0].mxu0
        %v739 = vadd.f32 0.0, %v738
        %v740 = vpop.f32.mrb[0].mxu0
        %741 = vmatprep.mubr.f32.mxu0 %v267
        %742 = vmatmul.mubr.f32.gmra.mrb[0].mxu0 %v235
        %v743 = vpop.f32.mrb[0].mxu0
        %v744 = vadd.f32 0.0, %v743
        %v745 = vpop.f32.mrb[0].mxu0
        %746 = vmatprep.mubr.f32.mxu0 %v268
        %747 = vmatmul.mubr.f32.gmra.mrb[0].mxu0 %v236
        %v748 = vpop.f32.mrb[0].mxu0
        %v749 = vadd.f32 0.0, %v748
        %v750 = vpop.f32.mrb[0].mxu0
        %751 = vmatprep.mubr.f32.mxu0 %v269
        %752 = vmatmul.mubr.f32.gmra.mrb[0].mxu0 %v237
        %v753 = vpop.f32.mrb[0].mxu0
        %v754 = vadd.f32 0.0, %v753
        %v755 = vpop.f32.mrb[0].mxu0
        %756 = vmatprep.mubr.f32.mxu0 %v270
        %757 = vmatmul.mubr.f32.gmra.mrb[0].mxu0 %v238
        %v758 = vpop.f32.mrb[0].mxu0
        %v759 = vadd.f32 0.0, %v758
        %v760 = vpop.f32.mrb[0].mxu0
        %761 = vmatprep.mubr.f32.mxu0 %v271
        %762 = vmatmul.mubr.f32.gmra.mrb[0].mxu0 %v239
        %v763 = vpop.f32.mrb[0].mxu0
        %v764 = vadd.f32 0.0, %v763
        %v765 = vpop.f32.mrb[0].mxu0
        %766 = vmatprep.mubr.f32.mxu0 %v272
        %767 = vmatmul.mubr.f32.gmra.mrb[0].mxu0 %v240
        %v768 = vpop.f32.mrb[0].mxu0
        %v769 = vadd.f32 0.0, %v768
        %v770 = vpop.f32.mrb[0].mxu0
        %771 = vmatprep.mubr.f32.mxu0 %v273
        %772 = vmatmul.mubr.f32.gmra.mrb[0].mxu0 %v241
        %v773 = vpop.f32.mrb[0].mxu0
        %v774 = vadd.f32 0.0, %v773
        %v775 = vpop.f32.mrb[0].mxu0
        %776 = vmatprep.mubr.f32.mxu0 %v274
        %777 = vmatmul.mubr.f32.gmra.mrb[0].mxu0 %v242
        %v778 = vpop.f32.mrb[0].mxu0
        %v779 = vadd.f32 0.0, %v778
        %v780 = vpop.f32.mrb[0].mxu0
        %781 = vmatprep.mubr.f32.mxu0 %v275
        %782 = vmatmul.mubr.f32.gmra.mrb[0].mxu0 %v243
        %v783 = vpop.f32.mrb[0].mxu0
        %v784 = vadd.f32 0.0, %v783
        %v785 = vpop.f32.mrb[0].mxu0
        %786 = vmatprep.mubr.f32.mxu0 %v276
        %787 = vmatmul.mubr.f32.gmra.mrb[0].mxu0 %v244
        %v788 = vpop.f32.mrb[0].mxu0
        %v789 = vadd.f32 0.0, %v788
        %v790 = vpop.f32.mrb[0].mxu0
        %791 = vmatprep.mubr.f32.mxu0 %v277
        %792 = vmatmul.mubr.f32.gmra.mrb[0].mxu0 %v245
        %v793 = vpop.f32.mrb[0].mxu0
        %v794 = vadd.f32 0.0, %v793
        %v795 = vpop.f32.mrb[0].mxu0
        %796 = vmatprep.mubr.f32.mxu0 %v278
        %797 = vmatmul.mubr.f32.gmra.mrb[0].mxu0 %v246
        %v798 = vpop.f32.mrb[0].mxu0
        %v799 = vadd.f32 0.0, %v798
        %v800 = vpop.f32.mrb[0].mxu0
        %801 = vmatprep.mubr.f32.mxu0 %v279
        %802 = vmatmul.mubr.f32.gmra.mrb[0].mxu0 %v247
        %v803 = vpop.f32.mrb[0].mxu0
        %v804 = vadd.f32 0.0, %v803
        %v805 = vpop.f32.mrb[0].mxu0
        %806 = vmatprep.mubr.f32.mxu0 %v280
        %807 = vmatmul.mubr.f32.gmra.mrb[0].mxu0 %v248
        %v808 = vpop.f32.mrb[0].mxu0
        %v809 = vadd.f32 0.0, %v808
        %v810 = vpop.f32.mrb[0].mxu0
        %811 = vmatprep.mubr.f32.mxu0 %v281
        %812 = vmatmul.mubr.f32.gmra.mrb[0].mxu0 %v249
        %v813 = vpop.f32.mrb[0].mxu0
        %v814 = vadd.f32 0.0, %v813
        %v815 = vpop.f32.mrb[0].mxu0
        %816 = vmatprep.mubr.f32.mxu0 %v282
        %817 = vmatmul.mubr.f32.gmra.mrb[0].mxu0 %v250
        %v818 = vpop.f32.mrb[0].mxu0
        %v819 = vadd.f32 0.0, %v818
        %v820 = vpop.f32.mrb[0].mxu0
        %821 = vmatprep.mubr.f32.mxu0 %v283
        %822 = vmatmul.mubr.f32.gmra.mrb[0].mxu0 %v251
        %v823 = vpop.f32.mrb[0].mxu0
        %v824 = vadd.f32 0.0, %v823
        %v825 = vpop.f32.mrb[0].mxu0
        %826 = vmatprep.mubr.f32.mxu0 %v284
        %827 = vmatmul.mubr.f32.gmra.mrb[0].mxu0 %v252
        %v828 = vpop.f32.mrb[0].mxu0
        %v829 = vadd.f32 0.0, %v828
        %v830 = vpop.f32.mrb[0].mxu0
        %831 = vmatprep.mubr.f32.mxu0 %v285
        %832 = vmatmul.mubr.f32.gmra.mrb[0].mxu0 %v253
        %v833 = vpop.f32.mrb[0].mxu0
        %v834 = vadd.f32 0.0, %v833
        %v835 = vpop.f32.mrb[0].mxu0
        %836 = vmatprep.mubr.f32.mxu0 %v286
        %837 = vmatmul.mubr.f32.gmra.mrb[0].mxu0 %v254
        %v838 = vpop.f32.mrb[0].mxu0
        %v839 = vadd.f32 0.0, %v838
        %v840 = vpop.f32.mrb[0].mxu0
        %841 = vmatprep.mubr.f32.mxu0 %v287
        %842 = vmatmul.mubr.f32.gmra.mrb[0].mxu0 %v255
        %v843 = vpop.f32.mrb[0].mxu0
        %v844 = vadd.f32 0.0, %v843
        %v845 = vpop.f32.mrb[0].mxu0
        %846 = vmatprep.mubr.f32.mxu0 %v288
        %847 = vmatmul.mubr.f32.gmra.mrb[0].mxu0 %v256
        %v848 = vpop.f32.mrb[0].mxu0
        %v849 = vadd.f32 0.0, %v848
        %v850 = vpop.f32.mrb[0].mxu0
        %851 = vmatprep.mubr.f32.mxu0 %v289
        %852 = vmatmul.mubr.f32.gmra.mrb[0].mxu0 %v257
        %v853 = vpop.f32.mrb[0].mxu0
        %v854 = vadd.f32 0.0, %v853
        %v855 = vpop.f32.mrb[0].mxu0
        %856 = vmatprep.mubr.f32.mxu0 %v290
        %857 = vmatmul.mubr.f32.gmra.mrb[0].mxu0 %v258
        %v858 = vpop.f32.mrb[0].mxu0
        %v859 = vadd.f32 0.0, %v858
        %v860 = vpop.f32.mrb[0].mxu0
        %861 = vmatprep.mubr.f32.mxu0 %v291
        %862 = vmatmul.mubr.f32.gmra.mrb[0].mxu0 %v259
        %v863 = vpop.f32.mrb[0].mxu0
        %v864 = vadd.f32 0.0, %v863
        %v865 = vpop.f32.mrb[0].mxu0
        %866 = vmatprep.mubr.f32.mxu0 %v292
        %867 = vmatmul.mubr.f32.gmra.mrb[0].mxu0 %v260
        %v868 = vpop.f32.mrb[0].mxu0
        %v869 = vadd.f32 0.0, %v868
        %v870 = vpop.f32.mrb[0].mxu0
        %871 = vmatprep.mubr.f32.mxu0 %v293
        %872 = vmatmul.mubr.f32.gmra.mrb[0].mxu0 %v261
        %v873 = vpop.f32.mrb[0].mxu0
        %v874 = vadd.f32 0.0, %v873
        %v875 = vpop.f32.mrb[0].mxu0
        %876 = vmatprep.mubr.f32.mxu0 %v294
        %877 = vmatmul.mubr.f32.gmra.mrb[0].mxu0 %v262
        %v878 = vpop.f32.mrb[0].mxu0
        %v879 = vadd.f32 0.0, %v878
        %v880 = vpop.f32.mrb[0].mxu0
        %881 = vmatprep.mubr.f32.mxu0 %v295
        %882 = vmatmul.mubr.f32.gmra.mrb[0].mxu0 %v263
        %v883 = vpop.f32.mrb[0].mxu0
        %v884 = vadd.f32 0.0, %v883
        %v885 = vpop.f32.mrb[0].mxu0
        %886 = vmatprep.mubr.f32.mxu0 %v296
        %887 = vmatmul.mubr.f32.gmra.mrb[0].mxu0 %v264
        %v888 = vpop.f32.mrb[0].mxu0
        %v889 = vadd.f32 0.0, %v888
        %v890 = vpop.f32.mrb[0].mxu0
        %891 = vdwg.mxu0
        %892 = vmatprep.subr.mxu0 0.0
        %893 = vmatpush1.msra.mxu0 %v555
        %894 = vmatprep.subr.mxu0 0.0
        %895 = vmatpush1.msra.mxu0 %v556
        %896 = vmatprep.subr.mxu0 0.0
        %897 = vmatpush1.msra.mxu0 %v557
        %898 = vmatprep.subr.mxu0 0.0
        %899 = vmatpush1.msra.mxu0 %v558
        %900 = vmatprep.subr.mxu0 0.0
        %901 = vmatpush1.msra.mxu0 %v559
        %902 = vmatprep.subr.mxu0 0.0
        %903 = vmatpush1.msra.mxu0 %v560
        %904 = vmatprep.subr.mxu0 0.0
        %905 = vmatpush1.msra.mxu0 %v561
        %906 = vmatprep.subr.mxu0 0.0
        %907 = vmatpush1.msra.mxu0 %v562
        %908 = vmatprep.subr.mxu0 0.0
        %909 = vmatpush1.msra.mxu0 %v563
        %910 = vmatprep.subr.mxu0 0.0
        %911 = vmatpush1.msra.mxu0 %v564
        %912 = vmatprep.subr.mxu0 0.0
        %913 = vmatpush1.msra.mxu0 %v565
        %914 = vmatprep.subr.mxu0 0.0
        %915 = vmatpush1.msra.mxu0 %v566
        %916 = vmatprep.subr.mxu0 0.0
        %917 = vmatpush1.msra.mxu0 %v567
        %918 = vmatprep.subr.mxu0 0.0
        %919 = vmatpush1.msra.mxu0 %v568
        %920 = vmatprep.subr.mxu0 0.0
        %921 = vmatpush1.msra.mxu0 %v569
        %922 = vmatprep.subr.mxu0 0.0
        %923 = vmatpush1.msra.mxu0 %v570
        %924 = vmatprep.subr.mxu0 0.0
        %925 = vmatpush1.msra.mxu0 %v571
        %926 = vmatprep.subr.mxu0 0.0
        %927 = vmatpush1.msra.mxu0 %v572
        %928 = vmatprep.subr.mxu0 0.0
        %929 = vmatpush1.msra.mxu0 %v573
        %930 = vmatprep.subr.mxu0 0.0
        %931 = vmatpush1.msra.mxu0 %v574
        %932 = vmatprep.subr.mxu0 0.0
        %933 = vmatpush1.msra.mxu0 %v575
        %934 = vmatprep.subr.mxu0 0.0
        %935 = vmatpush1.msra.mxu0 %v576
        %936 = vmatprep.subr.mxu0 0.0
        %937 = vmatpush1.msra.mxu0 %v577
        %938 = vmatprep.subr.mxu0 0.0
        %939 = vmatpush1.msra.mxu0 %v578
        %940 = vmatprep.subr.mxu0 0.0
        %941 = vmatpush1.msra.mxu0 %v579
        %942 = vmatprep.subr.mxu0 0.0
        %943 = vmatpush1.msra.mxu0 %v580
        %944 = vmatprep.subr.mxu0 0.0
        %945 = vmatpush1.msra.mxu0 %v581
        %946 = vmatprep.subr.mxu0 0.0
        %947 = vmatpush1.msra.mxu0 %v582
        %948 = vmatprep.subr.mxu0 0.0
        %949 = vmatpush1.msra.mxu0 %v583
        %950 = vmatprep.subr.mxu0 0.0
        %951 = vmatpush1.msra.mxu0 %v584
        %952 = vmatprep.subr.mxu0 0.0
        %953 = vmatpush1.msra.mxu0 %v585
        %954 = vmatprep.subr.mxu0 0.0
        %955 = vmatpush1.msra.mxu0 %v586
        %956 = vmatprep.mubr.f32.mxu0 %v330
        %957 = vmatmul.mubr.f32.gmra.mrb[0].mxu0 %v297
        %v958 = vpop.f32.mrb[0].mxu0
        %v959 = vadd.f32 %v734, %v958
        %v960 = vpop.f32.mrb[0].mxu0
        %961 = vmatprep.mubr.f32.mxu0 %v331
        %962 = vmatmul.mubr.f32.gmra.mrb[0].mxu0 %v298
        %v963 = vpop.f32.mrb[0].mxu0
        %v964 = vadd.f32 %v739, %v963
        %v965 = vpop.f32.mrb[0].mxu0
        %966 = vmatprep.mubr.f32.mxu0 %v332
        %967 = vmatmul.mubr.f32.gmra.mrb[0].mxu0 %v299
        %v968 = vpop.f32.mrb[0].mxu0
        %v969 = vadd.f32 %v744, %v968
        %v970 = vpop.f32.mrb[0].mxu0
        %971 = vmatprep.mubr.f32.mxu0 %v333
        %972 = vmatmul.mubr.f32.gmra.mrb[0].mxu0 %v300
        %v973 = vpop.f32.mrb[0].mxu0
        %v974 = vadd.f32 %v749, %v973
        %v975 = vpop.f32.mrb[0].mxu0
        %976 = vmatprep.mubr.f32.mxu0 %v334
        %977 = vmatmul.mubr.f32.gmra.mrb[0].mxu0 %v301
        %v978 = vpop.f32.mrb[0].mxu0
        %v979 = vadd.f32 %v754, %v978
        %v980 = vpop.f32.mrb[0].mxu0
        %981 = vmatprep.mubr.f32.mxu0 %v335
        %982 = vmatmul.mubr.f32.gmra.mrb[0].mxu0 %v302
        %v983 = vpop.f32.mrb[0].mxu0
        %v984 = vadd.f32 %v759, %v983
        %v985 = vpop.f32.mrb[0].mxu0
        %986 = vmatprep.mubr.f32.mxu0 %v336
        %987 = vmatmul.mubr.f32.gmra.mrb[0].mxu0 %v303
        %v988 = vpop.f32.mrb[0].mxu0
        %v989 = vadd.f32 %v764, %v988
        %v990 = vpop.f32.mrb[0].mxu0
        %991 = vmatprep.mubr.f32.mxu0 %v337
        %992 = vmatmul.mubr.f32.gmra.mrb[0].mxu0 %v304
        %v993 = vpop.f32.mrb[0].mxu0
        %v994 = vadd.f32 %v769, %v993
        %v995 = vpop.f32.mrb[0].mxu0
        %996 = vmatprep.mubr.f32.mxu0 %v338
        %997 = vmatmul.mubr.f32.gmra.mrb[0].mxu0 %v305
        %v998 = vpop.f32.mrb[0].mxu0
        %v999 = vadd.f32 %v774, %v998
        %v1000 = vpop.f32.mrb[0].mxu0
        %1001 = vmatprep.mubr.f32.mxu0 %v339
        %1002 = vmatmul.mubr.f32.gmra.mrb[0].mxu0 %v306
        %v1003 = vpop.f32.mrb[0].mxu0
        %v1004 = vadd.f32 %v779, %v1003
        %v1005 = vpop.f32.mrb[0].mxu0
        %1006 = vmatprep.mubr.f32.mxu0 %v340
        %1007 = vmatmul.mubr.f32.gmra.mrb[0].mxu0 %v307
        %v1008 = vpop.f32.mrb[0].mxu0
        %v1009 = vadd.f32 %v784, %v1008
        %v1010 = vpop.f32.mrb[0].mxu0
        %1011 = vmatprep.mubr.f32.mxu0 %v341
        %1012 = vmatmul.mubr.f32.gmra.mrb[0].mxu0 %v308
        %v1013 = vpop.f32.mrb[0].mxu0
        %v1014 = vadd.f32 %v789, %v1013
        %v1015 = vpop.f32.mrb[0].mxu0
        %1016 = vmatprep.mubr.f32.mxu0 %v342
        %1017 = vmatmul.mubr.f32.gmra.mrb[0].mxu0 %v309
        %v1018 = vpop.f32.mrb[0].mxu0
        %v1019 = vadd.f32 %v794, %v1018
        %v1020 = vpop.f32.mrb[0].mxu0
        %1021 = vmatprep.mubr.f32.mxu0 %v343
        %1022 = vmatmul.mubr.f32.gmra.mrb[0].mxu0 %v310
        %v1023 = vpop.f32.mrb[0].mxu0
        %v1024 = vadd.f32 %v799, %v1023
        %v1025 = vpop.f32.mrb[0].mxu0
        %1026 = vmatprep.mubr.f32.mxu0 %v344
        %1027 = vmatmul.mubr.f32.gmra.mrb[0].mxu0 %v311
        %v1028 = vpop.f32.mrb[0].mxu0
        %v1029 = vadd.f32 %v804, %v1028
        %v1030 = vpop.f32.mrb[0].mxu0
        %1031 = vmatprep.mubr.f32.mxu0 %v345
        %1032 = vmatmul.mubr.f32.gmra.mrb[0].mxu0 %v312
        %v1033 = vpop.f32.mrb[0].mxu0
        %v1034 = vadd.f32 %v809, %v1033
        %v1035 = vpop.f32.mrb[0].mxu0
        %1036 = vmatprep.mubr.f32.mxu0 %v346
        %1037 = vmatmul.mubr.f32.gmra.mrb[0].mxu0 %v313
        %v1038 = vpop.f32.mrb[0].mxu0
        %v1039 = vadd.f32 %v814, %v1038
        %v1040 = vpop.f32.mrb[0].mxu0
        %1041 = vmatprep.mubr.f32.mxu0 %v347
        %1042 = vmatmul.mubr.f32.gmra.mrb[0].mxu0 %v314
        %v1043 = vpop.f32.mrb[0].mxu0
        %v1044 = vadd.f32 %v819, %v1043
        %v1045 = vpop.f32.mrb[0].mxu0
        %1046 = vmatprep.mubr.f32.mxu0 %v348
        %1047 = vmatmul.mubr.f32.gmra.mrb[0].mxu0 %v315
        %v1048 = vpop.f32.mrb[0].mxu0
        %v1049 = vadd.f32 %v824, %v1048
        %v1050 = vpop.f32.mrb[0].mxu0
        %1051 = vmatprep.mubr.f32.mxu0 %v349
        %1052 = vmatmul.mubr.f32.gmra.mrb[0].mxu0 %v316
        %v1053 = vpop.f32.mrb[0].mxu0
        %v1054 = vadd.f32 %v829, %v1053
        %v1055 = vpop.f32.mrb[0].mxu0
        %1056 = vmatprep.mubr.f32.mxu0 %v350
        %1057 = vmatmul.mubr.f32.gmra.mrb[0].mxu0 %v317
        %v1058 = vpop.f32.mrb[0].mxu0
        %v1059 = vadd.f32 %v834, %v1058
        %v1060 = vpop.f32.mrb[0].mxu0
        %1061 = vmatprep.mubr.f32.mxu0 %v351
        %1062 = vmatmul.mubr.f32.gmra.mrb[0].mxu0 %v318
        %v1063 = vpop.f32.mrb[0].mxu0
        %v1064 = vadd.f32 %v839, %v1063
        %v1065 = vpop.f32.mrb[0].mxu0
        %1066 = vmatprep.mubr.f32.mxu0 %v352
        %1067 = vmatmul.mubr.f32.gmra.mrb[0].mxu0 %v319
        %v1068 = vpop.f32.mrb[0].mxu0
        %v1069 = vadd.f32 %v844, %v1068
        %v1070 = vpop.f32.mrb[0].mxu0
        %1071 = vmatprep.mubr.f32.mxu0 %v353
        %1072 = vmatmul.mubr.f32.gmra.mrb[0].mxu0 %v320
        %v1073 = vpop.f32.mrb[0].mxu0
        %v1074 = vadd.f32 %v849, %v1073
        %v1075 = vpop.f32.mrb[0].mxu0
        %1076 = vmatprep.mubr.f32.mxu0 %v354
        %1077 = vmatmul.mubr.f32.gmra.mrb[0].mxu0 %v321
        %v1078 = vpop.f32.mrb[0].mxu0
        %v1079 = vadd.f32 %v854, %v1078
        %v1080 = vpop.f32.mrb[0].mxu0
        %1081 = vmatprep.mubr.f32.mxu0 %v355
        %1082 = vmatmul.mubr.f32.gmra.mrb[0].mxu0 %v322
        %v1083 = vpop.f32.mrb[0].mxu0
        %v1084 = vadd.f32 %v859, %v1083
        %v1085 = vpop.f32.mrb[0].mxu0
        %1086 = vmatprep.mubr.f32.mxu0 %v356
        %1087 = vmatmul.mubr.f32.gmra.mrb[0].mxu0 %v323
        %v1088 = vpop.f32.mrb[0].mxu0
        %v1089 = vadd.f32 %v864, %v1088
        %v1090 = vpop.f32.mrb[0].mxu0
        %1091 = vmatprep.mubr.f32.mxu0 %v357
        %1092 = vmatmul.mubr.f32.gmra.mrb[0].mxu0 %v324
        %v1093 = vpop.f32.mrb[0].mxu0
        %v1094 = vadd.f32 %v869, %v1093
        %v1095 = vpop.f32.mrb[0].mxu0
        %1096 = vmatprep.mubr.f32.mxu0 %v358
        %1097 = vmatmul.mubr.f32.gmra.mrb[0].mxu0 %v325
        %v1098 = vpop.f32.mrb[0].mxu0
        %v1099 = vadd.f32 %v874, %v1098
        %v1100 = vpop.f32.mrb[0].mxu0
        %1101 = vmatprep.mubr.f32.mxu0 %v359
        %1102 = vmatmul.mubr.f32.gmra.mrb[0].mxu0 %v326
        %v1103 = vpop.f32.mrb[0].mxu0
        %v1104 = vadd.f32 %v879, %v1103
        %v1105 = vpop.f32.mrb[0].mxu0
        %1106 = vmatprep.mubr.f32.mxu0 %v360
        %1107 = vmatmul.mubr.f32.gmra.mrb[0].mxu0 %v327
        %v1108 = vpop.f32.mrb[0].mxu0
        %v1109 = vadd.f32 %v884, %v1108
        %v1110 = vpop.f32.mrb[0].mxu0
        %1111 = vmatprep.mubr.f32.mxu0 %v361
        %1112 = vmatmul.mubr.f32.gmra.mrb[0].mxu0 %v328
        %v1113 = vpop.f32.mrb[0].mxu0
        %v1114 = vadd.f32 %v889, %v1113
        %v1115 = vpop.f32.mrb[0].mxu0
        %1116 = vdwg.mxu0
        %1117 = vmatprep.subr.mxu0 0.0
        %1118 = vmatpush1.msra.mxu0 %v587
        %1119 = vmatprep.subr.mxu0 0.0
        %1120 = vmatpush1.msra.mxu0 %v588
        %1121 = vmatprep.subr.mxu0 0.0
        %1122 = vmatpush1.msra.mxu0 %v589
        %1123 = vmatprep.subr.mxu0 0.0
        %1124 = vmatpush1.msra.mxu0 %v590
        %1125 = vmatprep.subr.mxu0 0.0
        %1126 = vmatpush1.msra.mxu0 %v591
        %1127 = vmatprep.subr.mxu0 0.0
        %1128 = vmatpush1.msra.mxu0 %v592
        %1129 = vmatprep.subr.mxu0 0.0
        %1130 = vmatpush1.msra.mxu0 %v593
        %1131 = vmatprep.subr.mxu0 0.0
        %1132 = vmatpush1.msra.mxu0 %v594
        %1133 = vmatprep.subr.mxu0 0.0
        %1134 = vmatpush1.msra.mxu0 %v595
        %1135 = vmatprep.subr.mxu0 0.0
        %1136 = vmatpush1.msra.mxu0 %v596
        %1137 = vmatprep.subr.mxu0 0.0
        %1138 = vmatpush1.msra.mxu0 %v597
        %1139 = vmatprep.subr.mxu0 0.0
        %1140 = vmatpush1.msra.mxu0 %v598
        %1141 = vmatprep.subr.mxu0 0.0
        %1142 = vmatpush1.msra.mxu0 %v599
        %1143 = vmatprep.subr.mxu0 0.0
        %1144 = vmatpush1.msra.mxu0 %v600
        %1145 = vmatprep.subr.mxu0 0.0
        %1146 = vmatpush1.msra.mxu0 %v601
        %1147 = vmatprep.subr.mxu0 0.0
        %1148 = vmatpush1.msra.mxu0 %v602
        %1149 = vmatprep.subr.mxu0 0.0
        %1150 = vmatpush1.msra.mxu0 %v603
        %1151 = vmatprep.subr.mxu0 0.0
        %1152 = vmatpush1.msra.mxu0 %v604
        %1153 = vmatprep.subr.mxu0 0.0
        %1154 = vmatpush1.msra.mxu0 %v605
        %1155 = vmatprep.subr.mxu0 0.0
        %1156 = vmatpush1.msra.mxu0 %v606
        %1157 = vmatprep.subr.mxu0 0.0
        %1158 = vmatpush1.msra.mxu0 %v607
        %1159 = vmatprep.subr.mxu0 0.0
        %1160 = vmatpush1.msra.mxu0 %v608
        %1161 = vmatprep.subr.mxu0 0.0
        %1162 = vmatpush1.msra.mxu0 %v609
        %1163 = vmatprep.subr.mxu0 0.0
        %1164 = vmatpush1.msra.mxu0 %v610
        %1165 = vmatprep.subr.mxu0 0.0
        %1166 = vmatpush1.msra.mxu0 %v611
        %1167 = vmatprep.subr.mxu0 0.0
        %1168 = vmatpush1.msra.mxu0 %v612
        %1169 = vmatprep.subr.mxu0 0.0
        %1170 = vmatpush1.msra.mxu0 %v613
        %1171 = vmatprep.subr.mxu0 0.0
        %1172 = vmatpush1.msra.mxu0 %v614
        %1173 = vmatprep.subr.mxu0 0.0
        %1174 = vmatpush1.msra.mxu0 %v615
        %1175 = vmatprep.subr.mxu0 0.0
        %1176 = vmatpush1.msra.mxu0 %v616
        %1177 = vmatprep.subr.mxu0 0.0
        %1178 = vmatpush1.msra.mxu0 %v617
        %1179 = vmatprep.subr.mxu0 0.0
        %1180 = vmatpush1.msra.mxu0 %v618
        %1181 = vmatprep.mubr.f32.mxu0 %v394
        %1182 = vmatmul.mubr.f32.gmra.mrb[0].mxu0 %v362
        %v1183 = vpop.f32.mrb[0].mxu0
        %v1184 = vadd.f32 %v959, %v1183
        %v1185 = vpop.f32.mrb[0].mxu0
        %1186 = vmatprep.mubr.f32.mxu0 %v395
        %1187 = vmatmul.mubr.f32.gmra.mrb[0].mxu0 %v363
        %v1188 = vpop.f32.mrb[0].mxu0
        %v1189 = vadd.f32 %v964, %v1188
        %v1190 = vpop.f32.mrb[0].mxu0
        %1191 = vmatprep.mubr.f32.mxu0 %v396
        %1192 = vmatmul.mubr.f32.gmra.mrb[0].mxu0 %v364
        %v1193 = vpop.f32.mrb[0].mxu0
        %v1194 = vadd.f32 %v969, %v1193
        %v1195 = vpop.f32.mrb[0].mxu0
        %1196 = vmatprep.mubr.f32.mxu0 %v397
        %1197 = vmatmul.mubr.f32.gmra.mrb[0].mxu0 %v365
        %v1198 = vpop.f32.mrb[0].mxu0
        %v1199 = vadd.f32 %v974, %v1198
        %v1200 = vpop.f32.mrb[0].mxu0
        %1201 = vmatprep.mubr.f32.mxu0 %v398
        %1202 = vmatmul.mubr.f32.gmra.mrb[0].mxu0 %v366
        %v1203 = vpop.f32.mrb[0].mxu0
        %v1204 = vadd.f32 %v979, %v1203
        %v1205 = vpop.f32.mrb[0].mxu0
        %1206 = vmatprep.mubr.f32.mxu0 %v399
        %1207 = vmatmul.mubr.f32.gmra.mrb[0].mxu0 %v367
        %v1208 = vpop.f32.mrb[0].mxu0
        %v1209 = vadd.f32 %v984, %v1208
        %v1210 = vpop.f32.mrb[0].mxu0
        %1211 = vmatprep.mubr.f32.mxu0 %v400
        %1212 = vmatmul.mubr.f32.gmra.mrb[0].mxu0 %v368
        %v1213 = vpop.f32.mrb[0].mxu0
        %v1214 = vadd.f32 %v989, %v1213
        %v1215 = vpop.f32.mrb[0].mxu0
        %1216 = vmatprep.mubr.f32.mxu0 %v401
        %1217 = vmatmul.mubr.f32.gmra.mrb[0].mxu0 %v369
        %v1218 = vpop.f32.mrb[0].mxu0
        %v1219 = vadd.f32 %v994, %v1218
        %v1220 = vpop.f32.mrb[0].mxu0
        %1221 = vmatprep.mubr.f32.mxu0 %v402
        %1222 = vmatmul.mubr.f32.gmra.mrb[0].mxu0 %v370
        %v1223 = vpop.f32.mrb[0].mxu0
        %v1224 = vadd.f32 %v999, %v1223
        %v1225 = vpop.f32.mrb[0].mxu0
        %1226 = vmatprep.mubr.f32.mxu0 %v403
        %1227 = vmatmul.mubr.f32.gmra.mrb[0].mxu0 %v371
        %v1228 = vpop.f32.mrb[0].mxu0
        %v1229 = vadd.f32 %v1004, %v1228
        %v1230 = vpop.f32.mrb[0].mxu0
        %1231 = vmatprep.mubr.f32.mxu0 %v404
        %1232 = vmatmul.mubr.f32.gmra.mrb[0].mxu0 %v372
        %v1233 = vpop.f32.mrb[0].mxu0
        %v1234 = vadd.f32 %v1009, %v1233
        %v1235 = vpop.f32.mrb[0].mxu0
        %1236 = vmatprep.mubr.f32.mxu0 %v405
        %1237 = vmatmul.mubr.f32.gmra.mrb[0].mxu0 %v373
        %v1238 = vpop.f32.mrb[0].mxu0
        %v1239 = vadd.f32 %v1014, %v1238
        %v1240 = vpop.f32.mrb[0].mxu0
        %1241 = vmatprep.mubr.f32.mxu0 %v406
        %1242 = vmatmul.mubr.f32.gmra.mrb[0].mxu0 %v374
        %v1243 = vpop.f32.mrb[0].mxu0
        %v1244 = vadd.f32 %v1019, %v1243
        %v1245 = vpop.f32.mrb[0].mxu0
        %1246 = vmatprep.mubr.f32.mxu0 %v407
        %1247 = vmatmul.mubr.f32.gmra.mrb[0].mxu0 %v375
        %v1248 = vpop.f32.mrb[0].mxu0
        %v1249 = vadd.f32 %v1024, %v1248
        %v1250 = vpop.f32.mrb[0].mxu0
        %1251 = vmatprep.mubr.f32.mxu0 %v408
        %1252 = vmatmul.mubr.f32.gmra.mrb[0].mxu0 %v376
        %v1253 = vpop.f32.mrb[0].mxu0
        %v1254 = vadd.f32 %v1029, %v1253
        %v1255 = vpop.f32.mrb[0].mxu0
        %1256 = vmatprep.mubr.f32.mxu0 %v409
        %1257 = vmatmul.mubr.f32.gmra.mrb[0].mxu0 %v377
        %v1258 = vpop.f32.mrb[0].mxu0
        %v1259 = vadd.f32 %v1034, %v1258
        %v1260 = vpop.f32.mrb[0].mxu0
        %1261 = vmatprep.mubr.f32.mxu0 %v410
        %1262 = vmatmul.mubr.f32.gmra.mrb[0].mxu0 %v378
        %v1263 = vpop.f32.mrb[0].mxu0
        %v1264 = vadd.f32 %v1039, %v1263
        %v1265 = vpop.f32.mrb[0].mxu0
        %1266 = vmatprep.mubr.f32.mxu0 %v411
        %1267 = vmatmul.mubr.f32.gmra.mrb[0].mxu0 %v379
        %v1268 = vpop.f32.mrb[0].mxu0
        %v1269 = vadd.f32 %v1044, %v1268
        %v1270 = vpop.f32.mrb[0].mxu0
        %1271 = vmatprep.mubr.f32.mxu0 %v412
        %1272 = vmatmul.mubr.f32.gmra.mrb[0].mxu0 %v380
        %v1273 = vpop.f32.mrb[0].mxu0
        %v1274 = vadd.f32 %v1049, %v1273
        %v1275 = vpop.f32.mrb[0].mxu0
        %1276 = vmatprep.mubr.f32.mxu0 %v413
        %1277 = vmatmul.mubr.f32.gmra.mrb[0].mxu0 %v381
        %v1278 = vpop.f32.mrb[0].mxu0
        %v1279 = vadd.f32 %v1054, %v1278
        %v1280 = vpop.f32.mrb[0].mxu0
        %1281 = vmatprep.mubr.f32.mxu0 %v414
        %1282 = vmatmul.mubr.f32.gmra.mrb[0].mxu0 %v382
        %v1283 = vpop.f32.mrb[0].mxu0
        %v1284 = vadd.f32 %v1059, %v1283
        %v1285 = vpop.f32.mrb[0].mxu0
        %1286 = vmatprep.mubr.f32.mxu0 %v415
        %1287 = vmatmul.mubr.f32.gmra.mrb[0].mxu0 %v383
        %v1288 = vpop.f32.mrb[0].mxu0
        %v1289 = vadd.f32 %v1064, %v1288
        %v1290 = vpop.f32.mrb[0].mxu0
        %1291 = vmatprep.mubr.f32.mxu0 %v416
        %1292 = vmatmul.mubr.f32.gmra.mrb[0].mxu0 %v384
        %v1293 = vpop.f32.mrb[0].mxu0
        %v1294 = vadd.f32 %v1069, %v1293
        %v1295 = vpop.f32.mrb[0].mxu0
        %1296 = vmatprep.mubr.f32.mxu0 %v417
        %1297 = vmatmul.mubr.f32.gmra.mrb[0].mxu0 %v385
        %v1298 = vpop.f32.mrb[0].mxu0
        %v1299 = vadd.f32 %v1074, %v1298
        %v1300 = vpop.f32.mrb[0].mxu0
        %1301 = vmatprep.mubr.f32.mxu0 %v418
        %1302 = vmatmul.mubr.f32.gmra.mrb[0].mxu0 %v386
        %v1303 = vpop.f32.mrb[0].mxu0
        %v1304 = vadd.f32 %v1079, %v1303
        %v1305 = vpop.f32.mrb[0].mxu0
        %1306 = vmatprep.mubr.f32.mxu0 %v419
        %1307 = vmatmul.mubr.f32.gmra.mrb[0].mxu0 %v387
        %v1308 = vpop.f32.mrb[0].mxu0
        %v1309 = vadd.f32 %v1084, %v1308
        %v1310 = vpop.f32.mrb[0].mxu0
        %1311 = vmatprep.mubr.f32.mxu0 %v420
        %1312 = vmatmul.mubr.f32.gmra.mrb[0].mxu0 %v388
        %v1313 = vpop.f32.mrb[0].mxu0
        %v1314 = vadd.f32 %v1089, %v1313
        %v1315 = vpop.f32.mrb[0].mxu0
        %1316 = vmatprep.mubr.f32.mxu0 %v421
        %1317 = vmatmul.mubr.f32.gmra.mrb[0].mxu0 %v389
        %v1318 = vpop.f32.mrb[0].mxu0
        %v1319 = vadd.f32 %v1094, %v1318
        %v1320 = vpop.f32.mrb[0].mxu0
        %1321 = vmatprep.mubr.f32.mxu0 %v422
        %1322 = vmatmul.mubr.f32.gmra.mrb[0].mxu0 %v390
        %v1323 = vpop.f32.mrb[0].mxu0
        %v1324 = vadd.f32 %v1099, %v1323
        %v1325 = vpop.f32.mrb[0].mxu0
        %1326 = vmatprep.mubr.f32.mxu0 %v423
        %1327 = vmatmul.mubr.f32.gmra.mrb[0].mxu0 %v391
        %v1328 = vpop.f32.mrb[0].mxu0
        %v1329 = vadd.f32 %v1104, %v1328
        %v1330 = vpop.f32.mrb[0].mxu0
        %1331 = vmatprep.mubr.f32.mxu0 %v424
        %1332 = vmatmul.mubr.f32.gmra.mrb[0].mxu0 %v392
        %v1333 = vpop.f32.mrb[0].mxu0
        %v1334 = vadd.f32 %v1109, %v1333
        %v1335 = vpop.f32.mrb[0].mxu0
        %1336 = vmatprep.mubr.f32.mxu0 %v425
        %1337 = vmatmul.mubr.f32.gmra.mrb[0].mxu0 %v393
        %v1338 = vpop.f32.mrb[0].mxu0
        %v1339 = vadd.f32 %v1114, %v1338
        %v1340 = vpop.f32.mrb[0].mxu0
        %1341 = vdwg.mxu0
        %1342 = vmatprep.subr.mxu0 0.0
        %1343 = vmatpush1.msra.mxu0 %v619
        %1344 = vmatprep.subr.mxu0 0.0
        %1345 = vmatpush1.msra.mxu0 %v620
        %1346 = vmatprep.subr.mxu0 0.0
        %1347 = vmatpush1.msra.mxu0 %v621
        %1348 = vmatprep.subr.mxu0 0.0
        %1349 = vmatpush1.msra.mxu0 %v622
        %1350 = vmatprep.subr.mxu0 0.0
        %1351 = vmatpush1.msra.mxu0 %v623
        %1352 = vmatprep.subr.mxu0 0.0
        %1353 = vmatpush1.msra.mxu0 %v624
        %1354 = vmatprep.subr.mxu0 0.0
        %1355 = vmatpush1.msra.mxu0 %v625
        %1356 = vmatprep.subr.mxu0 0.0
        %1357 = vmatpush1.msra.mxu0 %v626
        %1358 = vmatprep.subr.mxu0 0.0
        %1359 = vmatpush1.msra.mxu0 %v627
        %1360 = vmatprep.subr.mxu0 0.0
        %1361 = vmatpush1.msra.mxu0 %v628
        %1362 = vmatprep.subr.mxu0 0.0
        %1363 = vmatpush1.msra.mxu0 %v629
        %1364 = vmatprep.subr.mxu0 0.0
        %1365 = vmatpush1.msra.mxu0 %v630
        %1366 = vmatprep.subr.mxu0 0.0
        %1367 = vmatpush1.msra.mxu0 %v631
        %1368 = vmatprep.subr.mxu0 0.0
        %1369 = vmatpush1.msra.mxu0 %v632
        %1370 = vmatprep.subr.mxu0 0.0
        %1371 = vmatpush1.msra.mxu0 %v633
        %1372 = vmatprep.subr.mxu0 0.0
        %1373 = vmatpush1.msra.mxu0 %v634
        %1374 = vmatprep.subr.mxu0 0.0
        %1375 = vmatpush1.msra.mxu0 %v635
        %1376 = vmatprep.subr.mxu0 0.0
        %1377 = vmatpush1.msra.mxu0 %v636
        %1378 = vmatprep.subr.mxu0 0.0
        %1379 = vmatpush1.msra.mxu0 %v637
        %1380 = vmatprep.subr.mxu0 0.0
        %1381 = vmatpush1.msra.mxu0 %v638
        %1382 = vmatprep.subr.mxu0 0.0
        %1383 = vmatpush1.msra.mxu0 %v639
        %1384 = vmatprep.subr.mxu0 0.0
        %1385 = vmatpush1.msra.mxu0 %v640
        %1386 = vmatprep.subr.mxu0 0.0
        %1387 = vmatpush1.msra.mxu0 %v641
        %1388 = vmatprep.subr.mxu0 0.0
        %1389 = vmatpush1.msra.mxu0 %v642
        %1390 = vmatprep.subr.mxu0 0.0
        %1391 = vmatpush1.msra.mxu0 %v643
        %1392 = vmatprep.subr.mxu0 0.0
        %1393 = vmatpush1.msra.mxu0 %v644
        %1394 = vmatprep.subr.mxu0 0.0
        %1395 = vmatpush1.msra.mxu0 %v645
        %1396 = vmatprep.subr.mxu0 0.0
        %1397 = vmatpush1.msra.mxu0 %v646
        %1398 = vmatprep.subr.mxu0 0.0
        %1399 = vmatpush1.msra.mxu0 %v647
        %1400 = vmatprep.subr.mxu0 0.0
        %1401 = vmatpush1.msra.mxu0 %v648
        %1402 = vmatprep.subr.mxu0 0.0
        %1403 = vmatpush1.msra.mxu0 %v649
        %1404 = vmatprep.subr.mxu0 0.0
        %1405 = vmatpush1.msra.mxu0 %v650
        %1406 = vmatprep.mubr.f32.mxu0 %v459
        %1407 = vmatmul.mubr.f32.gmra.mrb[0].mxu0 %v427
        %v1408 = vpop.f32.mrb[0].mxu0
        %v1409 = vadd.f32 %v1184, %v1408
        %v1410 = vpop.f32.mrb[0].mxu0
        %1411 = vmatprep.mubr.f32.mxu0 %v460
        %1412 = vmatmul.mubr.f32.gmra.mrb[0].mxu0 %v428
        %v1413 = vpop.f32.mrb[0].mxu0
        %v1414 = vadd.f32 %v1189, %v1413
        %v1415 = vpop.f32.mrb[0].mxu0
        %1416 = vmatprep.mubr.f32.mxu0 %v461
        %1417 = vmatmul.mubr.f32.gmra.mrb[0].mxu0 %v429
        %v1418 = vpop.f32.mrb[0].mxu0
        %v1419 = vadd.f32 %v1194, %v1418
        %v1420 = vpop.f32.mrb[0].mxu0
        %1421 = vmatprep.mubr.f32.mxu0 %v462
        %1422 = vmatmul.mubr.f32.gmra.mrb[0].mxu0 %v430
        %v1423 = vpop.f32.mrb[0].mxu0
        %v1424 = vadd.f32 %v1199, %v1423
        %v1425 = vpop.f32.mrb[0].mxu0
        %1426 = vmatprep.mubr.f32.mxu0 %v463
        %1427 = vmatmul.mubr.f32.gmra.mrb[0].mxu0 %v431
        %v1428 = vpop.f32.mrb[0].mxu0
        %v1429 = vadd.f32 %v1204, %v1428
        %v1430 = vpop.f32.mrb[0].mxu0
        %1431 = vmatprep.mubr.f32.mxu0 %v464
        %1432 = vmatmul.mubr.f32.gmra.mrb[0].mxu0 %v432
        %v1433 = vpop.f32.mrb[0].mxu0
        %v1434 = vadd.f32 %v1209, %v1433
        %v1435 = vpop.f32.mrb[0].mxu0
        %1436 = vmatprep.mubr.f32.mxu0 %v465
        %1437 = vmatmul.mubr.f32.gmra.mrb[0].mxu0 %v433
        %v1438 = vpop.f32.mrb[0].mxu0
        %v1439 = vadd.f32 %v1214, %v1438
        %v1440 = vpop.f32.mrb[0].mxu0
        %1441 = vmatprep.mubr.f32.mxu0 %v466
        %1442 = vmatmul.mubr.f32.gmra.mrb[0].mxu0 %v434
        %v1443 = vpop.f32.mrb[0].mxu0
        %v1444 = vadd.f32 %v1219, %v1443
        %v1445 = vpop.f32.mrb[0].mxu0
        %1446 = vmatprep.mubr.f32.mxu0 %v467
        %1447 = vmatmul.mubr.f32.gmra.mrb[0].mxu0 %v435
        %v1448 = vpop.f32.mrb[0].mxu0
        %v1449 = vadd.f32 %v1224, %v1448
        %v1450 = vpop.f32.mrb[0].mxu0
        %1451 = vmatprep.mubr.f32.mxu0 %v468
        %1452 = vmatmul.mubr.f32.gmra.mrb[0].mxu0 %v436
        %v1453 = vpop.f32.mrb[0].mxu0
        %v1454 = vadd.f32 %v1229, %v1453
        %v1455 = vpop.f32.mrb[0].mxu0
        %1456 = vmatprep.mubr.f32.mxu0 %v469
        %1457 = vmatmul.mubr.f32.gmra.mrb[0].mxu0 %v437
        %v1458 = vpop.f32.mrb[0].mxu0
        %v1459 = vadd.f32 %v1234, %v1458
        %v1460 = vpop.f32.mrb[0].mxu0
        %1461 = vmatprep.mubr.f32.mxu0 %v470
        %1462 = vmatmul.mubr.f32.gmra.mrb[0].mxu0 %v438
        %v1463 = vpop.f32.mrb[0].mxu0
        %v1464 = vadd.f32 %v1239, %v1463
        %v1465 = vpop.f32.mrb[0].mxu0
        %1466 = vmatprep.mubr.f32.mxu0 %v471
        %1467 = vmatmul.mubr.f32.gmra.mrb[0].mxu0 %v439
        %v1468 = vpop.f32.mrb[0].mxu0
        %v1469 = vadd.f32 %v1244, %v1468
        %v1470 = vpop.f32.mrb[0].mxu0
        %1471 = vmatprep.mubr.f32.mxu0 %v472
        %1472 = vmatmul.mubr.f32.gmra.mrb[0].mxu0 %v440
        %v1473 = vpop.f32.mrb[0].mxu0
        %v1474 = vadd.f32 %v1249, %v1473
        %v1475 = vpop.f32.mrb[0].mxu0
        %1476 = vmatprep.mubr.f32.mxu0 %v473
        %1477 = vmatmul.mubr.f32.gmra.mrb[0].mxu0 %v441
        %v1478 = vpop.f32.mrb[0].mxu0
        %v1479 = vadd.f32 %v1254, %v1478
        %v1480 = vpop.f32.mrb[0].mxu0
        %1481 = vmatprep.mubr.f32.mxu0 %v474
        %1482 = vmatmul.mubr.f32.gmra.mrb[0].mxu0 %v442
        %v1483 = vpop.f32.mrb[0].mxu0
        %v1484 = vadd.f32 %v1259, %v1483
        %v1485 = vpop.f32.mrb[0].mxu0
        %1486 = vmatprep.mubr.f32.mxu0 %v475
        %1487 = vmatmul.mubr.f32.gmra.mrb[0].mxu0 %v443
        %v1488 = vpop.f32.mrb[0].mxu0
        %v1489 = vadd.f32 %v1264, %v1488
        %v1490 = vpop.f32.mrb[0].mxu0
        %1491 = vmatprep.mubr.f32.mxu0 %v476
        %1492 = vmatmul.mubr.f32.gmra.mrb[0].mxu0 %v444
        %v1493 = vpop.f32.mrb[0].mxu0
        %v1494 = vadd.f32 %v1269, %v1493
        %v1495 = vpop.f32.mrb[0].mxu0
        %1496 = vmatprep.mubr.f32.mxu0 %v477
        %1497 = vmatmul.mubr.f32.gmra.mrb[0].mxu0 %v445
        %v1498 = vpop.f32.mrb[0].mxu0
        %v1499 = vadd.f32 %v1274, %v1498
        %v1500 = vpop.f32.mrb[0].mxu0
        %1501 = vmatprep.mubr.f32.mxu0 %v478
        %1502 = vmatmul.mubr.f32.gmra.mrb[0].mxu0 %v446
        %v1503 = vpop.f32.mrb[0].mxu0
        %v1504 = vadd.f32 %v1279, %v1503
        %v1505 = vpop.f32.mrb[0].mxu0
        %1506 = vmatprep.mubr.f32.mxu0 %v479
        %1507 = vmatmul.mubr.f32.gmra.mrb[0].mxu0 %v447
        %v1508 = vpop.f32.mrb[0].mxu0
        %v1509 = vadd.f32 %v1284, %v1508
        %v1510 = vpop.f32.mrb[0].mxu0
        %1511 = vmatprep.mubr.f32.mxu0 %v480
        %1512 = vmatmul.mubr.f32.gmra.mrb[0].mxu0 %v448
        %v1513 = vpop.f32.mrb[0].mxu0
        %v1514 = vadd.f32 %v1289, %v1513
        %v1515 = vpop.f32.mrb[0].mxu0
        %1516 = vmatprep.mubr.f32.mxu0 %v481
        %1517 = vmatmul.mubr.f32.gmra.mrb[0].mxu0 %v449
        %v1518 = vpop.f32.mrb[0].mxu0
        %v1519 = vadd.f32 %v1294, %v1518
        %v1520 = vpop.f32.mrb[0].mxu0
        %1521 = vmatprep.mubr.f32.mxu0 %v482
        %1522 = vmatmul.mubr.f32.gmra.mrb[0].mxu0 %v450
        %v1523 = vpop.f32.mrb[0].mxu0
        %v1524 = vadd.f32 %v1299, %v1523
        %v1525 = vpop.f32.mrb[0].mxu0
        %1526 = vmatprep.mubr.f32.mxu0 %v483
        %1527 = vmatmul.mubr.f32.gmra.mrb[0].mxu0 %v451
        %v1528 = vpop.f32.mrb[0].mxu0
        %v1529 = vadd.f32 %v1304, %v1528
        %v1530 = vpop.f32.mrb[0].mxu0
        %1531 = vmatprep.mubr.f32.mxu0 %v484
        %1532 = vmatmul.mubr.f32.gmra.mrb[0].mxu0 %v452
        %v1533 = vpop.f32.mrb[0].mxu0
        %v1534 = vadd.f32 %v1309, %v1533
        %v1535 = vpop.f32.mrb[0].mxu0
        %1536 = vmatprep.mubr.f32.mxu0 %v485
        %1537 = vmatmul.mubr.f32.gmra.mrb[0].mxu0 %v453
        %v1538 = vpop.f32.mrb[0].mxu0
        %v1539 = vadd.f32 %v1314, %v1538
        %v1540 = vpop.f32.mrb[0].mxu0
        %1541 = vmatprep.mubr.f32.mxu0 %v486
        %1542 = vmatmul.mubr.f32.gmra.mrb[0].mxu0 %v454
        %v1543 = vpop.f32.mrb[0].mxu0
        %v1544 = vadd.f32 %v1319, %v1543
        %v1545 = vpop.f32.mrb[0].mxu0
        %1546 = vmatprep.mubr.f32.mxu0 %v487
        %1547 = vmatmul.mubr.f32.gmra.mrb[0].mxu0 %v455
        %v1548 = vpop.f32.mrb[0].mxu0
        %v1549 = vadd.f32 %v1324, %v1548
        %v1550 = vpop.f32.mrb[0].mxu0
        %1551 = vmatprep.mubr.f32.mxu0 %v488
        %1552 = vmatmul.mubr.f32.gmra.mrb[0].mxu0 %v456
        %v1553 = vpop.f32.mrb[0].mxu0
        %v1554 = vadd.f32 %v1329, %v1553
        %v1555 = vpop.f32.mrb[0].mxu0
        %1556 = vmatprep.mubr.f32.mxu0 %v489
        %1557 = vmatmul.mubr.f32.gmra.mrb[0].mxu0 %v457
        %v1558 = vpop.f32.mrb[0].mxu0
        %v1559 = vadd.f32 %v1334, %v1558
        %v1560 = vpop.f32.mrb[0].mxu0
        %1561 = vmatprep.mubr.f32.mxu0 %v490
        %1562 = vmatmul.mubr.f32.gmra.mrb[0].mxu0 %v458
        %v1563 = vpop.f32.mrb[0].mxu0
        %v1564 = vadd.f32 %v1339, %v1563
        %v1565 = vpop.f32.mrb[0].mxu0
        %1566 = vdwg.mxu0
        %1567 = vmatprep.subr.mxu0 0.0
        %1568 = vmatpush1.msra.mxu0 %v651
        %1569 = vmatprep.subr.mxu0 0.0
        %1570 = vmatpush1.msra.mxu0 %v652
        %1571 = vmatprep.subr.mxu0 0.0
        %1572 = vmatpush1.msra.mxu0 %v653
        %1573 = vmatprep.subr.mxu0 0.0
        %1574 = vmatpush1.msra.mxu0 %v654
        %1575 = vmatprep.subr.mxu0 0.0
        %1576 = vmatpush1.msra.mxu0 %v655
        %1577 = vmatprep.subr.mxu0 0.0
        %1578 = vmatpush1.msra.mxu0 %v656
        %1579 = vmatprep.subr.mxu0 0.0
        %1580 = vmatpush1.msra.mxu0 %v657
        %1581 = vmatprep.subr.mxu0 0.0
        %1582 = vmatpush1.msra.mxu0 %v658
        %1583 = vmatprep.subr.mxu0 0.0
        %1584 = vmatpush1.msra.mxu0 %v659
        %1585 = vmatprep.subr.mxu0 0.0
        %1586 = vmatpush1.msra.mxu0 %v660
        %1587 = vmatprep.subr.mxu0 0.0
        %1588 = vmatpush1.msra.mxu0 %v661
        %1589 = vmatprep.subr.mxu0 0.0
        %1590 = vmatpush1.msra.mxu0 %v662
        %1591 = vmatprep.subr.mxu0 0.0
        %1592 = vmatpush1.msra.mxu0 %v663
        %1593 = vmatprep.subr.mxu0 0.0
        %1594 = vmatpush1.msra.mxu0 %v664
        %1595 = vmatprep.subr.mxu0 0.0
        %1596 = vmatpush1.msra.mxu0 %v665
        %1597 = vmatprep.subr.mxu0 0.0
        %1598 = vmatpush1.msra.mxu0 %v666
        %1599 = vmatprep.subr.mxu0 0.0
        %1600 = vmatpush1.msra.mxu0 0.0
        %1601 = vmatprep.subr.mxu0 0.0
        %1602 = vmatpush1.msra.mxu0 0.0
        %1603 = vmatprep.subr.mxu0 0.0
        %1604 = vmatpush1.msra.mxu0 0.0
        %1605 = vmatprep.subr.mxu0 0.0
        %1606 = vmatpush1.msra.mxu0 0.0
        %1607 = vmatprep.subr.mxu0 0.0
        %1608 = vmatpush1.msra.mxu0 0.0
        %1609 = vmatprep.subr.mxu0 0.0
        %1610 = vmatpush1.msra.mxu0 0.0
        %1611 = vmatprep.subr.mxu0 0.0
        %1612 = vmatpush1.msra.mxu0 0.0
        %1613 = vmatprep.subr.mxu0 0.0
        %1614 = vmatpush1.msra.mxu0 0.0
        %1615 = vmatprep.subr.mxu0 0.0
        %1616 = vmatpush1.msra.mxu0 0.0
        %1617 = vmatprep.subr.mxu0 0.0
        %1618 = vmatpush1.msra.mxu0 0.0
        %1619 = vmatprep.subr.mxu0 0.0
        %1620 = vmatpush1.msra.mxu0 0.0
        %1621 = vmatprep.subr.mxu0 0.0
        %1622 = vmatpush1.msra.mxu0 0.0
        %1623 = vmatprep.subr.mxu0 0.0
        %1624 = vmatpush1.msra.mxu0 0.0
        %1625 = vmatprep.subr.mxu0 0.0
        %1626 = vmatpush1.msra.mxu0 0.0
        %1627 = vmatprep.subr.mxu0 0.0
        %1628 = vmatpush1.msra.mxu0 0.0
        %1629 = vmatprep.subr.mxu0 0.0
        %1630 = vmatpush1.msra.mxu0 0.0
        %1631 = vmatprep.mubr.f32.mxu0 0.0
        %1632 = vmatmul.mubr.f32.gmra.mrb[0].mxu0 %v491
        %v1633 = vpop.f32.mrb[0].mxu0
        %v1634 = vadd.f32 %v1409, %v1633
        %v1635 = vpop.f32.mrb[0].mxu0
        %1636 = vmatprep.mubr.f32.mxu0 0.0
        %1637 = vmatmul.mubr.f32.gmra.mrb[0].mxu0 %v492
        %v1638 = vpop.f32.mrb[0].mxu0
        %v1639 = vadd.f32 %v1414, %v1638
        %v1640 = vpop.f32.mrb[0].mxu0
        %1641 = vmatprep.mubr.f32.mxu0 0.0
        %1642 = vmatmul.mubr.f32.gmra.mrb[0].mxu0 %v493
        %v1643 = vpop.f32.mrb[0].mxu0
        %v1644 = vadd.f32 %v1419, %v1643
        %v1645 = vpop.f32.mrb[0].mxu0
        %1646 = vmatprep.mubr.f32.mxu0 0.0
        %1647 = vmatmul.mubr.f32.gmra.mrb[0].mxu0 %v494
        %v1648 = vpop.f32.mrb[0].mxu0
        %v1649 = vadd.f32 %v1424, %v1648
        %v1650 = vpop.f32.mrb[0].mxu0
        %1651 = vmatprep.mubr.f32.mxu0 0.0
        %1652 = vmatmul.mubr.f32.gmra.mrb[0].mxu0 %v495
        %v1653 = vpop.f32.mrb[0].mxu0
        %v1654 = vadd.f32 %v1429, %v1653
        %v1655 = vpop.f32.mrb[0].mxu0
        %1656 = vmatprep.mubr.f32.mxu0 0.0
        %1657 = vmatmul.mubr.f32.gmra.mrb[0].mxu0 %v496
        %v1658 = vpop.f32.mrb[0].mxu0
        %v1659 = vadd.f32 %v1434, %v1658
        %v1660 = vpop.f32.mrb[0].mxu0
        %1661 = vmatprep.mubr.f32.mxu0 0.0
        %1662 = vmatmul.mubr.f32.gmra.mrb[0].mxu0 %v497
        %v1663 = vpop.f32.mrb[0].mxu0
        %v1664 = vadd.f32 %v1439, %v1663
        %v1665 = vpop.f32.mrb[0].mxu0
        %1666 = vmatprep.mubr.f32.mxu0 0.0
        %1667 = vmatmul.mubr.f32.gmra.mrb[0].mxu0 %v498
        %v1668 = vpop.f32.mrb[0].mxu0
        %v1669 = vadd.f32 %v1444, %v1668
        %v1670 = vpop.f32.mrb[0].mxu0
        %1671 = vmatprep.mubr.f32.mxu0 0.0
        %1672 = vmatmul.mubr.f32.gmra.mrb[0].mxu0 %v499
        %v1673 = vpop.f32.mrb[0].mxu0
        %v1674 = vadd.f32 %v1449, %v1673
        %v1675 = vpop.f32.mrb[0].mxu0
        %1676 = vmatprep.mubr.f32.mxu0 0.0
        %1677 = vmatmul.mubr.f32.gmra.mrb[0].mxu0 %v500
        %v1678 = vpop.f32.mrb[0].mxu0
        %v1679 = vadd.f32 %v1454, %v1678
        %v1680 = vpop.f32.mrb[0].mxu0
        %1681 = vmatprep.mubr.f32.mxu0 0.0
        %1682 = vmatmul.mubr.f32.gmra.mrb[0].mxu0 %v501
        %v1683 = vpop.f32.mrb[0].mxu0
        %v1684 = vadd.f32 %v1459, %v1683
        %v1685 = vpop.f32.mrb[0].mxu0
        %1686 = vmatprep.mubr.f32.mxu0 0.0
        %1687 = vmatmul.mubr.f32.gmra.mrb[0].mxu0 %v502
        %v1688 = vpop.f32.mrb[0].mxu0
        %v1689 = vadd.f32 %v1464, %v1688
        %v1690 = vpop.f32.mrb[0].mxu0
        %1691 = vmatprep.mubr.f32.mxu0 0.0
        %1692 = vmatmul.mubr.f32.gmra.mrb[0].mxu0 %v503
        %v1693 = vpop.f32.mrb[0].mxu0
        %v1694 = vadd.f32 %v1469, %v1693
        %v1695 = vpop.f32.mrb[0].mxu0
        %1696 = vmatprep.mubr.f32.mxu0 0.0
        %1697 = vmatmul.mubr.f32.gmra.mrb[0].mxu0 %v504
        %v1698 = vpop.f32.mrb[0].mxu0
        %v1699 = vadd.f32 %v1474, %v1698
        %v1700 = vpop.f32.mrb[0].mxu0
        %1701 = vmatprep.mubr.f32.mxu0 0.0
        %1702 = vmatmul.mubr.f32.gmra.mrb[0].mxu0 %v505
        %v1703 = vpop.f32.mrb[0].mxu0
        %v1704 = vadd.f32 %v1479, %v1703
        %v1705 = vpop.f32.mrb[0].mxu0
        %1706 = vmatprep.mubr.f32.mxu0 0.0
        %1707 = vmatmul.mubr.f32.gmra.mrb[0].mxu0 %v506
        %v1708 = vpop.f32.mrb[0].mxu0
        %v1709 = vadd.f32 %v1484, %v1708
        %v1710 = vpop.f32.mrb[0].mxu0
        %1711 = vmatprep.mubr.f32.mxu0 0.0
        %1712 = vmatmul.mubr.f32.gmra.mrb[0].mxu0 %v507
        %v1713 = vpop.f32.mrb[0].mxu0
        %v1714 = vadd.f32 %v1489, %v1713
        %v1715 = vpop.f32.mrb[0].mxu0
        %1716 = vmatprep.mubr.f32.mxu0 0.0
        %1717 = vmatmul.mubr.f32.gmra.mrb[0].mxu0 %v508
        %v1718 = vpop.f32.mrb[0].mxu0
        %v1719 = vadd.f32 %v1494, %v1718
        %v1720 = vpop.f32.mrb[0].mxu0
        %1721 = vmatprep.mubr.f32.mxu0 0.0
        %1722 = vmatmul.mubr.f32.gmra.mrb[0].mxu0 %v509
        %v1723 = vpop.f32.mrb[0].mxu0
        %v1724 = vadd.f32 %v1499, %v1723
        %v1725 = vpop.f32.mrb[0].mxu0
        %1726 = vmatprep.mubr.f32.mxu0 0.0
        %1727 = vmatmul.mubr.f32.gmra.mrb[0].mxu0 %v510
        %v1728 = vpop.f32.mrb[0].mxu0
        %v1729 = vadd.f32 %v1504, %v1728
        %v1730 = vpop.f32.mrb[0].mxu0
        %1731 = vmatprep.mubr.f32.mxu0 0.0
        %1732 = vmatmul.mubr.f32.gmra.mrb[0].mxu0 %v511
        %v1733 = vpop.f32.mrb[0].mxu0
        %v1734 = vadd.f32 %v1509, %v1733
        %v1735 = vpop.f32.mrb[0].mxu0
        %1736 = vmatprep.mubr.f32.mxu0 0.0
        %1737 = vmatmul.mubr.f32.gmra.mrb[0].mxu0 %v512
        %v1738 = vpop.f32.mrb[0].mxu0
        %v1739 = vadd.f32 %v1514, %v1738
        %v1740 = vpop.f32.mrb[0].mxu0
        %1741 = vmatprep.mubr.f32.mxu0 0.0
        %1742 = vmatmul.mubr.f32.gmra.mrb[0].mxu0 %v513
        %v1743 = vpop.f32.mrb[0].mxu0
        %v1744 = vadd.f32 %v1519, %v1743
        %v1745 = vpop.f32.mrb[0].mxu0
        %1746 = vmatprep.mubr.f32.mxu0 0.0
        %1747 = vmatmul.mubr.f32.gmra.mrb[0].mxu0 %v514
        %v1748 = vpop.f32.mrb[0].mxu0
        %v1749 = vadd.f32 %v1524, %v1748
        %v1750 = vpop.f32.mrb[0].mxu0
        %1751 = vmatprep.mubr.f32.mxu0 0.0
        %1752 = vmatmul.mubr.f32.gmra.mrb[0].mxu0 %v515
        %v1753 = vpop.f32.mrb[0].mxu0
        %v1754 = vadd.f32 %v1529, %v1753
        %v1755 = vpop.f32.mrb[0].mxu0
        %1756 = vmatprep.mubr.f32.mxu0 0.0
        %1757 = vmatmul.mubr.f32.gmra.mrb[0].mxu0 %v516
        %v1758 = vpop.f32.mrb[0].mxu0
        %v1759 = vadd.f32 %v1534, %v1758
        %v1760 = vpop.f32.mrb[0].mxu0
        %1761 = vmatprep.mubr.f32.mxu0 0.0
        %1762 = vmatmul.mubr.f32.gmra.mrb[0].mxu0 %v517
        %v1763 = vpop.f32.mrb[0].mxu0
        %v1764 = vadd.f32 %v1539, %v1763
        %v1765 = vpop.f32.mrb[0].mxu0
        %1766 = vmatprep.mubr.f32.mxu0 0.0
        %1767 = vmatmul.mubr.f32.gmra.mrb[0].mxu0 %v518
        %v1768 = vpop.f32.mrb[0].mxu0
        %v1769 = vadd.f32 %v1544, %v1768
        %v1770 = vpop.f32.mrb[0].mxu0
        %1771 = vmatprep.mubr.f32.mxu0 0.0
        %1772 = vmatmul.mubr.f32.gmra.mrb[0].mxu0 %v519
        %v1773 = vpop.f32.mrb[0].mxu0
        %v1774 = vadd.f32 %v1549, %v1773
        %v1775 = vpop.f32.mrb[0].mxu0
        %1776 = vmatprep.mubr.f32.mxu0 0.0
        %1777 = vmatmul.mubr.f32.gmra.mrb[0].mxu0 %v520
        %v1778 = vpop.f32.mrb[0].mxu0
        %v1779 = vadd.f32 %v1554, %v1778
        %v1780 = vpop.f32.mrb[0].mxu0
        %1781 = vmatprep.mubr.f32.mxu0 0.0
        %1782 = vmatmul.mubr.f32.gmra.mrb[0].mxu0 %v521
        %v1783 = vpop.f32.mrb[0].mxu0
        %v1784 = vadd.f32 %v1559, %v1783
        %v1785 = vpop.f32.mrb[0].mxu0
        %1786 = vmatprep.mubr.f32.mxu0 0.0
        %1787 = vmatmul.mubr.f32.gmra.mrb[0].mxu0 %v522
        %v1788 = vpop.f32.mrb[0].mxu0
        %v1789 = vadd.f32 %v1564, %v1788
        %v1790 = vpop.f32.mrb[0].mxu0
        %1791 = vdwg.mxu0
        %1792 = vst [vmem:[%s219] sm:$0xff] %v1634
        %1793 = vst [vmem:[%s219 + $0x8] sm:$0xff] %v1639
        %1794 = vst [vmem:[%s219 + $0x10] sm:$0xff] %v1644
        %1795 = vst [vmem:[%s219 + $0x18] sm:$0xff] %v1649
        %1796 = vst [vmem:[%s219 + $0x20] sm:$0xff] %v1654
        %1797 = vst [vmem:[%s219 + $0x28] sm:$0xff] %v1659
        %1798 = vst [vmem:[%s219 + $0x30] sm:$0xff] %v1664
        %1799 = vst [vmem:[%s219 + $0x38] sm:$0xff] %v1669
        %1800 = vst [vmem:[%s219 + $0x40] sm:$0xff] %v1674
        %1801 = vst [vmem:[%s219 + $0x48] sm:$0xff] %v1679
        %1802 = vst [vmem:[%s219 + $0x50] sm:$0xff] %v1684
        %1803 = vst [vmem:[%s219 + $0x58] sm:$0xff] %v1689
        %1804 = vst [vmem:[%s219 + $0x60] sm:$0xff] %v1694
        %1805 = vst [vmem:[%s219 + $0x68] sm:$0xff] %v1699
        %1806 = vst [vmem:[%s219 + $0x70] sm:$0xff] %v1704
        %1807 = vst [vmem:[%s219 + $0x78] sm:$0xff] %v1709
        %1808 = vst [vmem:[%s219 + $0x80] sm:$0xff] %v1714
        %1809 = vst [vmem:[%s219 + $0x88] sm:$0xff] %v1719
        %1810 = vst [vmem:[%s219 + $0x90] sm:$0xff] %v1724
        %1811 = vst [vmem:[%s219 + $0x98] sm:$0xff] %v1729
        %1812 = vst [vmem:[%s219 + $0xa0] sm:$0xff] %v1734
        %1813 = vst [vmem:[%s219 + $0xa8] sm:$0xff] %v1739
        %1814 = vst [vmem:[%s219 + $0xb0] sm:$0xff] %v1744
        %1815 = vst [vmem:[%s219 + $0xb8] sm:$0xff] %v1749
        %1816 = vst [vmem:[%s219 + $0xc0] sm:$0xff] %v1754
        %1817 = vst [vmem:[%s219 + $0xc8] sm:$0xff] %v1759
        %1818 = vst [vmem:[%s219 + $0xd0] sm:$0xff] %v1764
        %1819 = vst [vmem:[%s219 + $0xd8] sm:$0xff] %v1769
        %1820 = vst [vmem:[%s219 + $0xe0] sm:$0xff] %v1774
        %1821 = vst [vmem:[%s219 + $0xe8] sm:$0xff] %v1779
        %1822 = vst [vmem:[%s219 + $0xf0] sm:$0xff] %v1784
        %1823 = vst [vmem:[%s219 + $0xf8] sm:$0xff] %v1789
        %p1824 = scmp.eq.s32.totalorder %s25, 0
        // Predicated region
        $region29: #{tpu_custom_call.1} parent=27 // pred_check
          %p1825 = pneg %p1824
        $region30: #{tpu_custom_call.1} parent=27 // pred_check_branch
          %1827 = sbr.rel (%p1825) target = $region32
        $region31: #{tpu_custom_call.1} parent=27 // pred_region
          %1828 = vst [vmem:[#allocation4] sm:$0x1] 0.0
          %1829 = vst [vmem:[#allocation6] sm:$0x1] 0.0
        $region32: #{tpu_custom_call.1} parent=27 // pred_fallthru
          _
        %v1830 = vld [vmem:[#allocation4] sm:$0x1]
        %v1831 = vadd.f32 %v1634, %v1639
        %v1832 = vadd.f32 %v1831, %v1644
        %v1833 = vadd.f32 %v1832, %v1649
        %v1834 = vadd.f32 %v1833, %v1654
        %v1835 = vadd.f32 %v1834, %v1659
        %v1836 = vadd.f32 %v1835, %v1664
        %v1837 = vadd.f32 %v1836, %v1669
        %v1838 = vadd.f32 %v1837, %v1674
        %v1839 = vadd.f32 %v1838, %v1679
        %v1840 = vadd.f32 %v1839, %v1684
        %v1841 = vadd.f32 %v1840, %v1689
        %v1842 = vadd.f32 %v1841, %v1694
        %v1843 = vadd.f32 %v1842, %v1699
        %v1844 = vadd.f32 %v1843, %v1704
        %v1845 = vadd.f32 %v1844, %v1709
        %v1846 = vadd.f32 %v1845, %v1714
        %v1847 = vadd.f32 %v1846, %v1719
        %v1848 = vadd.f32 %v1847, %v1724
        %v1849 = vadd.f32 %v1848, %v1729
        %v1850 = vadd.f32 %v1849, %v1734
        %v1851 = vadd.f32 %v1850, %v1739
        %v1852 = vadd.f32 %v1851, %v1744
        %v1853 = vadd.f32 %v1852, %v1749
        %v1854 = vadd.f32 %v1853, %v1754
        %v1855 = vadd.f32 %v1854, %v1759
        %v1856 = vadd.f32 %v1855, %v1764
        %v1857 = vadd.f32 %v1856, %v1769
        %v1858 = vadd.f32 %v1857, %v1774
        %v1859 = vadd.f32 %v1858, %v1779
        %v1860 = vadd.f32 %v1859, %v1784
        %v1861 = vadd.f32 %v1860, %v1789
        %v1862 = vrot.slane %v1861, 4
        %v1863 = vadd.f32 %v1861, %v1862
        %v1864 = vrot.slane %v1863, 2
        %v1865 = vadd.f32 %v1863, %v1864
        %v1866 = vrot.slane %v1865, 1
        %v1867 = vadd.f32 %v1865, %v1866
        %v1868 = vadd.f32 %v1830, %v1867
        %1869 = vst [vmem:[#allocation4] sm:$0x1] %v1868
        %v1870 = vld [vmem:[#allocation6] sm:$0x1]
        %v1871 = vmul.f32 %v1634, %v1634
        %v1872 = vmul.f32 %v1639, %v1639
        %v1873 = vmul.f32 %v1644, %v1644
        %v1874 = vmul.f32 %v1649, %v1649
        %v1875 = vmul.f32 %v1654, %v1654
        %v1876 = vmul.f32 %v1659, %v1659
        %v1877 = vmul.f32 %v1664, %v1664
        %v1878 = vmul.f32 %v1669, %v1669
        %v1879 = vmul.f32 %v1674, %v1674
        %v1880 = vmul.f32 %v1679, %v1679
        %v1881 = vmul.f32 %v1684, %v1684
        %v1882 = vmul.f32 %v1689, %v1689
        %v1883 = vmul.f32 %v1694, %v1694
        %v1884 = vmul.f32 %v1699, %v1699
        %v1885 = vmul.f32 %v1704, %v1704
        %v1886 = vmul.f32 %v1709, %v1709
        %v1887 = vmul.f32 %v1714, %v1714
        %v1888 = vmul.f32 %v1719, %v1719
        %v1889 = vmul.f32 %v1724, %v1724
        %v1890 = vmul.f32 %v1729, %v1729
        %v1891 = vmul.f32 %v1734, %v1734
        %v1892 = vmul.f32 %v1739, %v1739
        %v1893 = vmul.f32 %v1744, %v1744
        %v1894 = vmul.f32 %v1749, %v1749
        %v1895 = vmul.f32 %v1754, %v1754
        %v1896 = vmul.f32 %v1759, %v1759
        %v1897 = vmul.f32 %v1764, %v1764
        %v1898 = vmul.f32 %v1769, %v1769
        %v1899 = vmul.f32 %v1774, %v1774
        %v1900 = vmul.f32 %v1779, %v1779
        %v1901 = vmul.f32 %v1784, %v1784
        %v1902 = vmul.f32 %v1789, %v1789
        %v1903 = vadd.f32 %v1871, %v1872
        %v1904 = vadd.f32 %v1903, %v1873
        %v1905 = vadd.f32 %v1904, %v1874
        %v1906 = vadd.f32 %v1905, %v1875
        %v1907 = vadd.f32 %v1906, %v1876
        %v1908 = vadd.f32 %v1907, %v1877
        %v1909 = vadd.f32 %v1908, %v1878
        %v1910 = vadd.f32 %v1909, %v1879
        %v1911 = vadd.f32 %v1910, %v1880
        %v1912 = vadd.f32 %v1911, %v1881
        %v1913 = vadd.f32 %v1912, %v1882
        %v1914 = vadd.f32 %v1913, %v1883
        %v1915 = vadd.f32 %v1914, %v1884
        %v1916 = vadd.f32 %v1915, %v1885
        %v1917 = vadd.f32 %v1916, %v1886
        %v1918 = vadd.f32 %v1917, %v1887
        %v1919 = vadd.f32 %v1918, %v1888
        %v1920 = vadd.f32 %v1919, %v1889
        %v1921 = vadd.f32 %v1920, %v1890
        %v1922 = vadd.f32 %v1921, %v1891
        %v1923 = vadd.f32 %v1922, %v1892
        %v1924 = vadd.f32 %v1923, %v1893
        %v1925 = vadd.f32 %v1924, %v1894
        %v1926 = vadd.f32 %v1925, %v1895
        %v1927 = vadd.f32 %v1926, %v1896
        %v1928 = vadd.f32 %v1927, %v1897
        %v1929 = vadd.f32 %v1928, %v1898
        %v1930 = vadd.f32 %v1929, %v1899
        %v1931 = vadd.f32 %v1930, %v1900
        %v1932 = vadd.f32 %v1931, %v1901
        %v1933 = vadd.f32 %v1932, %v1902
        %v1934 = vrot.slane %v1933, 4
        %v1935 = vadd.f32 %v1933, %v1934
        %v1936 = vrot.slane %v1935, 2
        %v1937 = vadd.f32 %v1935, %v1936
        %v1938 = vrot.slane %v1937, 1
        %v1939 = vadd.f32 %v1937, %v1938
        %v1940 = vadd.f32 %v1870, %v1939
        %1941 = vst [vmem:[#allocation6] sm:$0x1] %v1940
        %s1942 = sand.u32 %s94, 1
        %s1943 = scalar_lea.sflag [#allocation3], %s1942
        %s1944 = sand.u32 %s94, 1
        %s1945 = smul.addr %s1944, 256
        %s1946 = scalar_lea.vmem [#allocation2], %s1945
        // Predicated region
        $region33: #{tpu_custom_call.1} parent=27 // pred_check
          %p1947 = pneg %p104
        $region34: #{tpu_custom_call.1} parent=27 // pred_check_branch
          %1949 = sbr.rel (%p1947) target = $region36
        $region35: #{tpu_custom_call.1} parent=27 // pred_region
          %s1951 = ssub.s32 4096, 4096
          %1952 = vsyncadd %s1943, %s1951
          %s1953 = smul.addr %s25, 32
          %s1954 = sadd.s32 %s24, %s1953
          %s1955 = smul.addr %s1954, 128
          %s1956 = scalar_lea.hbm %s2, %s1955
          %s1957 = sshll.u32 %s1946, 4
          %s1958 = int_to_ptr.vmem [resolvable:$true] %s1957
          %1963 = dma.vmem_to_hbm [thread:$0]  %s1958, 4096, %s1956, %s1943, 128, 128, 8
        $region36: #{tpu_custom_call.1} parent=27 // pred_fallthru
          _
        // Predicated region
        $region37: #{tpu_custom_call.1} parent=27 // pred_check
          %p1964 = pneg %p130
        $region38: #{tpu_custom_call.1} parent=27 // pred_check_branch
          %1966 = sbr.rel (%p1964) target = $region40
        $region39: #{tpu_custom_call.1} parent=27 // pred_region
          %s1968 = ssub.s32 16, 16
          %1969 = vsyncadd [#allocation5], %s1968
          %s1970 = smul.addr %s24, 16
          %s1971 = scalar_lea.hbm %s3, %s1970
          %s1973 = sshll.u32 [#allocation4], 4
          %s1974 = int_to_ptr.vmem [resolvable:$true] %s1973
          %1976 = dma.vmem_to_hbm [thread:$0]  %s1974, 16, %s1971, [#allocation5]
        $region40: #{tpu_custom_call.1} parent=27 // pred_fallthru
          _
        // Predicated region
        $region41: #{tpu_custom_call.1} parent=27 // pred_check
          %p1977 = pneg %p156
        $region42: #{tpu_custom_call.1} parent=27 // pred_check_branch
          %1979 = sbr.rel (%p1977) target = $region44
        $region43: #{tpu_custom_call.1} parent=27 // pred_region
          %s1981 = ssub.s32 16, 16
          %1982 = vsyncadd [#allocation5], %s1981
          %s1983 = smul.addr %s24, 16
          %s1984 = scalar_lea.hbm %s4, %s1983
          %s1986 = sshll.u32 [#allocation6], 4
          %s1987 = int_to_ptr.vmem [resolvable:$true] %s1986
          %1989 = dma.vmem_to_hbm [thread:$0]  %s1987, 16, %s1984, [#allocation5]
        $region44: #{tpu_custom_call.1} parent=27 // pred_fallthru
          _
        // Predicated region
        $region45: #{tpu_custom_call.1} parent=27 // pred_check
          %p1990 = pneg %p130
        $region46: #{tpu_custom_call.1} parent=27 // pred_check_branch
          %1992 = sbr.rel (%p1990) target = $region48
        $region47: #{tpu_custom_call.1} parent=27 // pred_region
          %1993 = dma.done [#allocation5], 16
        $region48: #{tpu_custom_call.1} parent=27 // pred_fallthru
          _
        // Predicated region
        $region49: #{tpu_custom_call.1} parent=27 // pred_check
          %p1994 = pneg %p156
        $region50: #{tpu_custom_call.1} parent=27 // pred_check_branch
          %1996 = sbr.rel (%p1994) target = $region52
        $region51: #{tpu_custom_call.1} parent=27 // pred_region
          %1997 = dma.done [#allocation5], 16
        $region52: #{tpu_custom_call.1} parent=27 // pred_fallthru
          _
      $region28: #{tpu_custom_call.1} parent=5 // pred_fallthru
        _
      %p1998 = scmp.le.s32.totalorder 2, %s15
      // Predicated region
      $region53: #{tpu_custom_call.1} parent=5 // pred_check
        %p1999 = pneg %p1998
      $region54: #{tpu_custom_call.1} parent=5 // pred_check_branch
        %2001 = sbr.rel (%p1999) target = $region56
      $region55: #{tpu_custom_call.1} parent=5 // pred_region
        %s2002 = ssub.s32 %s15, 2
        // Predicated region
        $region57: #{tpu_custom_call.1} parent=55 // pred_check
          %p2003 = pneg %p110
        $region58: #{tpu_custom_call.1} parent=55 // pred_check_branch
          %2005 = sbr.rel (%p2003) target = $region60
        $region59: #{tpu_custom_call.1} parent=55 // pred_region
          %s2006 = sand.u32 %s95, 1
          %s2007 = scalar_lea.sflag [#allocation3], %s2006
          %s2008 = sand.u32 %s95, 1
          %s2009 = smul.addr %s2008, 256
          %s2010 = scalar_lea.vmem [#allocation2], %s2009
          %2011 = dma.done %s2007, 4096
        $region60: #{tpu_custom_call.1} parent=55 // pred_fallthru
          _
      $region56: #{tpu_custom_call.1} parent=5 // pred_fallthru
        _
    $region6: #{tpu_custom_call.1} parent=1 // loop_footer
      %s19 = sadd.s32 1, %s15
    $region7: #{tpu_custom_call.1} parent=1 // loop_footer_branch
      %14 = sbr.rel target = $region3
    $region8: #{tpu_custom_call.1} parent=1 // loop_exit
      _
    %2012 = vsyncpa [#allocation3], 1
    %s2013 = scalar_lea.sflag [#allocation3], 1
    %2014 = vsyncpa %s2013, 1
    %2015 = vsyncpa [#allocation5], 1

</llo_original>
